<compile_context>
chip_gen: v7x
topology: tpu7x:2x2x1
jax: 0.10.0
libtpu: 0.0.40
codegen_flags: <defaults>
</compile_context>

<pallas_src>
import functools
import math

import numpy as np
import jax
import jax.numpy as jnp
from jax.experimental import pallas as pl
from jax.experimental.pallas import tpu as pltpu


def calculate_conv2d_padding(stride, kernel_size, d_in, d_out, dilation=1):
    if isinstance(stride, int):
        stride = (stride, stride)
    if isinstance(kernel_size, int):
        kernel_size = (kernel_size, kernel_size)
    if isinstance(dilation, int):
        dilation = (dilation, dilation)
    h_in, w_in = d_in
    h_out, w_out = d_out
    h_k, w_k = kernel_size
    h_s, w_s = stride
    h_d, w_d = dilation
    padding_h = math.ceil(((h_out - 1) * h_s + h_k - h_in + (h_k - 1) * (h_d - 1)) / 2)
    padding_w = math.ceil(((w_out - 1) * w_s + w_k - w_in + (w_k - 1) * (w_d - 1)) / 2)
    assert padding_h >= 0 and padding_w >= 0
    return (padding_h, padding_w)


# ----------------------------- Pallas kernel -------------------------------- #
def resblock_kernel(x_ref, w1_ref, b1_ref, w2_ref, b2_ref, wa_ref, ba_ref,
                    m_ref, o_ref, *, H, W):
    # x_ref:  (C, HW)      one image; channels on sublanes, HW on lanes (HW % 128 == 0)
    # w1_ref: (CMP, C)     1x1 conv (BN folded); Cmid zero-padded to CMP (mult of 8)
    # b1_ref: (CMP, 1)
    # w2_ref: (9, C, CMP)  3x3 conv (BN folded), tap-major, (out, mid) per tap
    # b2_ref: (C, 1)
    # wa_ref: (C, C)       attention 1x1 conv (out x in)
    # ba_ref: (C, 1)
    # m_ref:  (9, 1, HW)   precomputed 0/1 boundary masks per tap (host-built constant)
    # o_ref:  (C, HW)
    HW = H * W

    x = x_ref[...].astype(jnp.float32)                             # (C, HW)

    # ---- conv1 (1x1) + folded BN + ReLU: one MXU matmul ---------------------
    h = jnp.dot(w1_ref[...], x, preferred_element_type=jnp.float32) + b1_ref[...]
    h = jnp.maximum(h, 0.0)                                        # (CMP, HW)

    # ---- conv2 (3x3) + folded BN + ReLU -------------------------------------
    # 9 small matmuls accumulated in registers (no im2col scratch, no VMEM
    # stores).  Implicit zero padding: out-of-image taps are multiplied by
    # precomputed 0/1 masks; pltpu.roll wraps only inside this one image and
    # every wrapped lane is masked to zero, so wraparound is never observed.
    w2 = w2_ref[...]                                               # (9, C, CMP)
    masks = m_ref[...]                                             # (9, 1, HW)
    acc = None
    for kh in range(3):
        for kw in range(3):
            dh, dw = kh - 1, kw - 1
            t = kh * 3 + kw
            s = dh * W + dw
            if s == 0:
                slab = h
            else:
                slab = pltpu.roll(h, shift=(-s) % HW, axis=1) * masks[t]
            d = jnp.dot(w2[t], slab, preferred_element_type=jnp.float32)
            acc = d if acc is None else acc + d
    conv = jnp.maximum(acc + b2_ref[...], 0.0)                     # (C, HW)

    # ---- attention branch (1x1 conv + sigmoid) and residual combine ---------
    a = jax.nn.sigmoid(
        jnp.dot(wa_ref[...], x, preferred_element_type=jnp.float32) + ba_ref[...])
    o_ref[...] = (x * a + conv).astype(o_ref.dtype)


def resblock_pallas(x_nchw, w1p, b1p, w2t, b2, wa, ba, masks):
    N, C, H, W = x_nchw.shape
    CMP = w1p.shape[0]
    HW = H * W
    assert HW % 128 == 0, "flattened spatial dim must be a multiple of 128"

    # NCHW -> (N, C, H*W): a pure reshape, no transpose, no extra HBM round trip.
    x3d = x_nchw.reshape(N, C, HW)

    kernel = functools.partial(resblock_kernel, H=H, W=W)

    cost = pl.CostEstimate(
        flops=int(2 * N * HW * (CMP * C + 9 * C * CMP + C * C)),
        transcendentals=int(N * HW * C),
        bytes_accessed=int(4 * (2 * N * C * HW + w1p.size + b1p.size + w2t.size
                                + b2.size + wa.size + ba.size + masks.size)),
    )

    # NOTE: VMEM use per grid step is tiny (<0.1 MiB; the big im2col scratch is
    # gone).  When scaling H/W/C, re-derive the block budget against v7x's
    # 64 MiB (32 MiB default scoped): 2x(in block) + 2x(out block) + weights,
    # and raise vmem_limit_bytes via pltpu.CompilerParams if needed.
    out3d = pl.pallas_call(
        kernel,
        out_shape=jax.ShapeDtypeStruct((N, C, HW), x_nchw.dtype),
        grid_spec=pltpu.PrefetchScalarGridSpec(
            num_scalar_prefetch=0,
            grid=(N,),                                   # >=2 steps -> both v7x TCs busy
            in_specs=[
                pl.BlockSpec((None, C, HW), lambda b: (b, 0, 0)),   # one image per step
                pl.BlockSpec((CMP, C), lambda b: (0, 0)),
                pl.BlockSpec((CMP, 1), lambda b: (0, 0)),
                pl.BlockSpec((9, C, CMP), lambda b: (0, 0, 0)),
                pl.BlockSpec((C, 1), lambda b: (0, 0)),
                pl.BlockSpec((C, C), lambda b: (0, 0)),
                pl.BlockSpec((C, 1), lambda b: (0, 0)),
                pl.BlockSpec((9, 1, HW), lambda b: (0, 0, 0)),
            ],
            out_specs=pl.BlockSpec((None, C, HW), lambda b: (b, 0, 0)),
        ),
        compiler_params=pltpu.CompilerParams(
            dimension_semantics=("parallel",)),          # images are independent
        cost_estimate=cost,
    )(x3d, w1p, b1p, w2t, b2, wa, ba, masks)

    return out3d.reshape(N, C, H, W)


# -------------- boundary masks (depend only on H, W; built once) ------------ #
def make_tap_masks(H, W):
    HW = H * W
    p = np.arange(HW)
    row, col = p // W, p % W
    m = np.ones((9, 1, HW), np.float32)
    for kh in range(3):
        for kw in range(3):
            dh, dw = kh - 1, kw - 1
            valid = ((row + dh >= 0) & (row + dh < H) &
                     (col + dw >= 0) & (col + dw < W))
            m[kh * 3 + kw, 0] = valid.astype(np.float32)
    return jnp.asarray(m)


# ------------------- BN folding + weight packing (plain-JAX glue) ----------- #
def fold_and_pack_params(p, eps=1e-5):
    C, Cmid = p["w1_raw"].shape
    CMP = ((Cmid + 7) // 8) * 8   # pad Cmid to a full sublane tile (free: vregs pad anyway)

    s1 = p["g1"] / jnp.sqrt(p["v1"] + eps)
    w1 = (p["w1_raw"] * s1[None, :]).T                         # (Cmid, C)
    b1 = (p["b1_raw"] - p["m1"]) * s1 + p["be1"]               # (Cmid,)
    s2 = p["g2"] / jnp.sqrt(p["v2"] + eps)
    w2 = p["w2_raw"] * s2                                      # (3,3,Cmid,C)
    b2 = (p["b2_raw"] - p["m2"]) * s2 + p["be2"]               # (C,)

    w1p = jnp.zeros((CMP, C), jnp.float32).at[:Cmid].set(w1)
    b1p = jnp.zeros((CMP, 1), jnp.float32).at[:Cmid, 0].set(b1)
    w2p = jnp.zeros((3, 3, CMP, C), jnp.float32).at[:, :, :Cmid].set(w2)
    w2t = jnp.transpose(w2p, (0, 1, 3, 2)).reshape(9, C, CMP)  # tap-major, (out, mid)
    wa = p["wa_raw"].T                                         # (C_out, C_in)
    return w1p, b1p, w2t, b2.reshape(C, 1), wa, p["ba_raw"].reshape(C, 1)


# ----------------------------- reference (plain JAX) ------------------------ #
def bn_eval(x, gamma, beta, mean, var, eps=1e-5):
    return (x - mean) / jnp.sqrt(var + eps) * gamma + beta


def ref_forward_nhwc(x, p):
    dn = ("NHWC", "HWIO", "NHWC")
    h = jax.lax.conv_general_dilated(x, p["w1_raw"][None, None], (1, 1), "VALID",
                                     dimension_numbers=dn) + p["b1_raw"]
    h = jax.nn.relu(bn_eval(h, p["g1"], p["be1"], p["m1"], p["v1"]))
    c = jax.lax.conv_general_dilated(h, p["w2_raw"], (1, 1), ((1, 1), (1, 1)),
                                     dimension_numbers=dn) + p["b2_raw"]
    c = jax.nn.relu(bn_eval(c, p["g2"], p["be2"], p["m2"], p["v2"]))
    a = jax.nn.sigmoid(
        jax.lax.conv_general_dilated(x, p["wa_raw"][None, None], (1, 1), "VALID",
                                     dimension_numbers=dn) + p["ba_raw"])
    return x * a + c


# ----------------------------- main ----------------------------------------- #
if __name__ == "__main__":
    N, C, H, W = 2, 4, 16, 16          # in_channel=4, in_dim=(16,16)
    Cmid = C // 2
    ksz, stride, dilation = 3, 1, 1
    pad = calculate_conv2d_padding(stride, ksz, (H, W), (H, W), dilation)
    assert pad == (1, 1)
    eps = 1e-5

    key = jax.random.PRNGKey(0)
    ks = jax.random.split(key, 16)

    # synthetic, deterministic parameters (shapes from the module's __init__)
    p = dict(
        w1_raw=jax.random.normal(ks[0], (C, Cmid), jnp.float32) * 0.3,
        b1_raw=jax.random.normal(ks[1], (Cmid,), jnp.float32) * 0.1,
        g1=jax.random.normal(ks[2], (Cmid,), jnp.float32) * 0.1 + 1.0,
        be1=jax.random.normal(ks[3], (Cmid,), jnp.float32) * 0.1,
        m1=jax.random.normal(ks[4], (Cmid,), jnp.float32) * 0.1,
        v1=jnp.abs(jax.random.normal(ks[5], (Cmid,), jnp.float32)) * 0.2 + 0.8,
        w2_raw=jax.random.normal(ks[6], (3, 3, Cmid, C), jnp.float32) * 0.2,
        b2_raw=jax.random.normal(ks[7], (C,), jnp.float32) * 0.1,
        g2=jax.random.normal(ks[8], (C,), jnp.float32) * 0.1 + 1.0,
        be2=jax.random.normal(ks[9], (C,), jnp.float32) * 0.1,
        m2=jax.random.normal(ks[10], (C,), jnp.float32) * 0.1,
        v2=jnp.abs(jax.random.normal(ks[11], (C,), jnp.float32)) * 0.2 + 0.8,
        wa_raw=jax.random.normal(ks[12], (C, C), jnp.float32) * 0.3,
        ba_raw=jax.random.normal(ks[13], (C,), jnp.float32) * 0.1,
    )

    w1p, b1p, w2t, b2k, wak, bak = fold_and_pack_params(p, eps)
    masks = make_tap_masks(H, W)

    # input (PyTorch-style NCHW)
    x_nchw = jax.random.normal(ks[14], (N, C, H, W), jnp.float32)

    y_nchw = resblock_pallas(x_nchw, w1p, b1p, w2t, b2k, wak, bak, masks)
    jax.block_until_ready(y_nchw)

    # correctness check against a plain-JAX reference of the PyTorch forward
    x_nhwc = jnp.transpose(x_nchw, (0, 2, 3, 1))
    y_ref_nchw = jnp.transpose(ref_forward_nhwc(x_nhwc, p), (0, 3, 1, 2))
    np.testing.assert_allclose(np.asarray(y_nchw), np.asarray(y_ref_nchw),
                               rtol=1e-4, atol=1e-4)

    print("KERNEL_OK")
</pallas_src>

<mosaic_0001>
module attributes {stable_mosaic.version = 11 : i64} {
  func.func @resblock_kernel(%arg0: i32, %arg1: memref<1x4x256xf32, #tpu.memory_space<vmem>>, %arg2: memref<8x4xf32, #tpu.memory_space<vmem>>, %arg3: memref<8x1xf32, #tpu.memory_space<vmem>>, %arg4: memref<9x4x8xf32, #tpu.memory_space<vmem>>, %arg5: memref<4x1xf32, #tpu.memory_space<vmem>>, %arg6: memref<4x4xf32, #tpu.memory_space<vmem>>, %arg7: memref<4x1xf32, #tpu.memory_space<vmem>>, %arg8: memref<9x1x256xf32, #tpu.memory_space<vmem>>, %arg9: memref<1x4x256xf32, #tpu.memory_space<vmem>>) attributes {dimension_semantics = [#tpu.dimension_semantics<parallel>], iteration_bounds = array<i64: 2>, scalar_prefetch = 0 : i64, scratch_operands = 0 : i64, tpu.core_type = #tpu.core_type<tc>, window_params = [{transform_indices = @transform_0, window_bounds = array<i64: 1, 4, 256>}, {pipeline_mode = #tpu.pipeline_mode<synchronous>, transform_indices = @transform_1, window_bounds = array<i64: 8, 4>}, {pipeline_mode = #tpu.pipeline_mode<synchronous>, transform_indices = @transform_2, window_bounds = array<i64: 8, 1>}, {pipeline_mode = #tpu.pipeline_mode<synchronous>, transform_indices = @transform_3, window_bounds = array<i64: 9, 4, 8>}, {pipeline_mode = #tpu.pipeline_mode<synchronous>, transform_indices = @transform_4, window_bounds = array<i64: 4, 1>}, {pipeline_mode = #tpu.pipeline_mode<synchronous>, transform_indices = @transform_5, window_bounds = array<i64: 4, 4>}, {pipeline_mode = #tpu.pipeline_mode<synchronous>, transform_indices = @transform_6, window_bounds = array<i64: 4, 1>}, {pipeline_mode = #tpu.pipeline_mode<synchronous>, transform_indices = @transform_7, window_bounds = array<i64: 9, 1, 256>}, {transform_indices = @transform_8, window_bounds = array<i64: 1, 4, 256>}]} {
    %c0 = arith.constant 0 : index
    %c0_0 = arith.constant 0 : index
    %c0_1 = arith.constant 0 : index
    %0 = vector.load %arg1[%c0, %c0_0, %c0_1] : memref<1x4x256xf32, #tpu.memory_space<vmem>>, vector<1x4x256xf32>
    %1 = vector.shape_cast %0 : vector<1x4x256xf32> to vector<4x256xf32>
    %c0_2 = arith.constant 0 : index
    %c0_3 = arith.constant 0 : index
    %2 = vector.load %arg2[%c0_2, %c0_3] : memref<8x4xf32, #tpu.memory_space<vmem>>, vector<8x4xf32>
    %cst = arith.constant dense<0.000000e+00> : vector<8x256xf32>
    %3 = tpu.matmul %2, %1, %cst {dimension_numbers = #tpu.dot_dimension_numbers<[1], [0], [0], [1], [0, 0, 1, 1], [], []>} : vector<8x4xf32>, vector<4x256xf32>, vector<8x256xf32> -> vector<8x256xf32>
    %c0_4 = arith.constant 0 : index
    %c0_5 = arith.constant 0 : index
    %4 = vector.load %arg3[%c0_4, %c0_5] : memref<8x1xf32, #tpu.memory_space<vmem>>, vector<8x1xf32>
    %5 = vector.broadcast %4 : vector<8x1xf32> to vector<8x256xf32>
    %6 = arith.addf %3, %5 : vector<8x256xf32>
    %cst_6 = arith.constant 0.000000e+00 : f32
    %7 = vector.broadcast %cst_6 : f32 to vector<8x256xf32>
    %8 = arith.maximumf %6, %7 : vector<8x256xf32>
    %c0_7 = arith.constant 0 : index
    %c0_8 = arith.constant 0 : index
    %c0_9 = arith.constant 0 : index
    %9 = vector.load %arg4[%c0_7, %c0_8, %c0_9] : memref<9x4x8xf32, #tpu.memory_space<vmem>>, vector<9x4x8xf32>
    %c0_10 = arith.constant 0 : index
    %c0_11 = arith.constant 0 : index
    %c0_12 = arith.constant 0 : index
    %10 = vector.load %arg8[%c0_10, %c0_11, %c0_12] : memref<9x1x256xf32, #tpu.memory_space<vmem>>, vector<9x1x256xf32>
    %c17_i32 = arith.constant 17 : i32
    %11 = tpu.dynamic_rotate %8 by %c17_i32 dim 1 : vector<8x256xf32>, i32 -> vector<8x256xf32>
    %12 = vector.extract_strided_slice %10 {offsets = [0, 0, 0], sizes = [1, 1, 256], strides = [1, 1, 1]} : vector<9x1x256xf32> to vector<1x1x256xf32>
    %13 = vector.shape_cast %12 : vector<1x1x256xf32> to vector<1x256xf32>
    %14 = vector.broadcast %13 : vector<1x256xf32> to vector<8x256xf32>
    %15 = arith.mulf %11, %14 : vector<8x256xf32>
    %16 = vector.extract_strided_slice %9 {offsets = [0, 0, 0], sizes = [1, 4, 8], strides = [1, 1, 1]} : vector<9x4x8xf32> to vector<1x4x8xf32>
    %17 = vector.shape_cast %16 : vector<1x4x8xf32> to vector<4x8xf32>
    %cst_13 = arith.constant dense<0.000000e+00> : vector<4x256xf32>
    %18 = tpu.matmul %17, %15, %cst_13 {dimension_numbers = #tpu.dot_dimension_numbers<[1], [0], [0], [1], [0, 0, 1, 1], [], []>} : vector<4x8xf32>, vector<8x256xf32>, vector<4x256xf32> -> vector<4x256xf32>
    %c16_i32 = arith.constant 16 : i32
    %19 = tpu.dynamic_rotate %8 by %c16_i32 dim 1 : vector<8x256xf32>, i32 -> vector<8x256xf32>
    %20 = vector.extract_strided_slice %10 {offsets = [1, 0, 0], sizes = [1, 1, 256], strides = [1, 1, 1]} : vector<9x1x256xf32> to vector<1x1x256xf32>
    %21 = vector.shape_cast %20 : vector<1x1x256xf32> to vector<1x256xf32>
    %22 = vector.broadcast %21 : vector<1x256xf32> to vector<8x256xf32>
    %23 = arith.mulf %19, %22 : vector<8x256xf32>
    %24 = vector.extract_strided_slice %9 {offsets = [1, 0, 0], sizes = [1, 4, 8], strides = [1, 1, 1]} : vector<9x4x8xf32> to vector<1x4x8xf32>
    %25 = vector.shape_cast %24 : vector<1x4x8xf32> to vector<4x8xf32>
    %cst_14 = arith.constant dense<0.000000e+00> : vector<4x256xf32>
    %26 = tpu.matmul %25, %23, %cst_14 {dimension_numbers = #tpu.dot_dimension_numbers<[1], [0], [0], [1], [0, 0, 1, 1], [], []>} : vector<4x8xf32>, vector<8x256xf32>, vector<4x256xf32> -> vector<4x256xf32>
    %27 = arith.addf %18, %26 : vector<4x256xf32>
    %c15_i32 = arith.constant 15 : i32
    %28 = tpu.dynamic_rotate %8 by %c15_i32 dim 1 : vector<8x256xf32>, i32 -> vector<8x256xf32>
    %29 = vector.extract_strided_slice %10 {offsets = [2, 0, 0], sizes = [1, 1, 256], strides = [1, 1, 1]} : vector<9x1x256xf32> to vector<1x1x256xf32>
    %30 = vector.shape_cast %29 : vector<1x1x256xf32> to vector<1x256xf32>
    %31 = vector.broadcast %30 : vector<1x256xf32> to vector<8x256xf32>
    %32 = arith.mulf %28, %31 : vector<8x256xf32>
    %33 = vector.extract_strided_slice %9 {offsets = [2, 0, 0], sizes = [1, 4, 8], strides = [1, 1, 1]} : vector<9x4x8xf32> to vector<1x4x8xf32>
    %34 = vector.shape_cast %33 : vector<1x4x8xf32> to vector<4x8xf32>
    %cst_15 = arith.constant dense<0.000000e+00> : vector<4x256xf32>
    %35 = tpu.matmul %34, %32, %cst_15 {dimension_numbers = #tpu.dot_dimension_numbers<[1], [0], [0], [1], [0, 0, 1, 1], [], []>} : vector<4x8xf32>, vector<8x256xf32>, vector<4x256xf32> -> vector<4x256xf32>
    %36 = arith.addf %27, %35 : vector<4x256xf32>
    %c1_i32 = arith.constant 1 : i32
    %37 = tpu.dynamic_rotate %8 by %c1_i32 dim 1 : vector<8x256xf32>, i32 -> vector<8x256xf32>
    %38 = vector.extract_strided_slice %10 {offsets = [3, 0, 0], sizes = [1, 1, 256], strides = [1, 1, 1]} : vector<9x1x256xf32> to vector<1x1x256xf32>
    %39 = vector.shape_cast %38 : vector<1x1x256xf32> to vector<1x256xf32>
    %40 = vector.broadcast %39 : vector<1x256xf32> to vector<8x256xf32>
    %41 = arith.mulf %37, %40 : vector<8x256xf32>
    %42 = vector.extract_strided_slice %9 {offsets = [3, 0, 0], sizes = [1, 4, 8], strides = [1, 1, 1]} : vector<9x4x8xf32> to vector<1x4x8xf32>
    %43 = vector.shape_cast %42 : vector<1x4x8xf32> to vector<4x8xf32>
    %cst_16 = arith.constant dense<0.000000e+00> : vector<4x256xf32>
    %44 = tpu.matmul %43, %41, %cst_16 {dimension_numbers = #tpu.dot_dimension_numbers<[1], [0], [0], [1], [0, 0, 1, 1], [], []>} : vector<4x8xf32>, vector<8x256xf32>, vector<4x256xf32> -> vector<4x256xf32>
    %45 = arith.addf %36, %44 : vector<4x256xf32>
    %46 = vector.extract_strided_slice %9 {offsets = [4, 0, 0], sizes = [1, 4, 8], strides = [1, 1, 1]} : vector<9x4x8xf32> to vector<1x4x8xf32>
    %47 = vector.shape_cast %46 : vector<1x4x8xf32> to vector<4x8xf32>
    %cst_17 = arith.constant dense<0.000000e+00> : vector<4x256xf32>
    %48 = tpu.matmul %47, %8, %cst_17 {dimension_numbers = #tpu.dot_dimension_numbers<[1], [0], [0], [1], [0, 0, 1, 1], [], []>} : vector<4x8xf32>, vector<8x256xf32>, vector<4x256xf32> -> vector<4x256xf32>
    %49 = arith.addf %45, %48 : vector<4x256xf32>
    %c255_i32 = arith.constant 255 : i32
    %50 = tpu.dynamic_rotate %8 by %c255_i32 dim 1 : vector<8x256xf32>, i32 -> vector<8x256xf32>
    %51 = vector.extract_strided_slice %10 {offsets = [5, 0, 0], sizes = [1, 1, 256], strides = [1, 1, 1]} : vector<9x1x256xf32> to vector<1x1x256xf32>
    %52 = vector.shape_cast %51 : vector<1x1x256xf32> to vector<1x256xf32>
    %53 = vector.broadcast %52 : vector<1x256xf32> to vector<8x256xf32>
    %54 = arith.mulf %50, %53 : vector<8x256xf32>
    %55 = vector.extract_strided_slice %9 {offsets = [5, 0, 0], sizes = [1, 4, 8], strides = [1, 1, 1]} : vector<9x4x8xf32> to vector<1x4x8xf32>
    %56 = vector.shape_cast %55 : vector<1x4x8xf32> to vector<4x8xf32>
    %cst_18 = arith.constant dense<0.000000e+00> : vector<4x256xf32>
    %57 = tpu.matmul %56, %54, %cst_18 {dimension_numbers = #tpu.dot_dimension_numbers<[1], [0], [0], [1], [0, 0, 1, 1], [], []>} : vector<4x8xf32>, vector<8x256xf32>, vector<4x256xf32> -> vector<4x256xf32>
    %58 = arith.addf %49, %57 : vector<4x256xf32>
    %c241_i32 = arith.constant 241 : i32
    %59 = tpu.dynamic_rotate %8 by %c241_i32 dim 1 : vector<8x256xf32>, i32 -> vector<8x256xf32>
    %60 = vector.extract_strided_slice %10 {offsets = [6, 0, 0], sizes = [1, 1, 256], strides = [1, 1, 1]} : vector<9x1x256xf32> to vector<1x1x256xf32>
    %61 = vector.shape_cast %60 : vector<1x1x256xf32> to vector<1x256xf32>
    %62 = vector.broadcast %61 : vector<1x256xf32> to vector<8x256xf32>
    %63 = arith.mulf %59, %62 : vector<8x256xf32>
    %64 = vector.extract_strided_slice %9 {offsets = [6, 0, 0], sizes = [1, 4, 8], strides = [1, 1, 1]} : vector<9x4x8xf32> to vector<1x4x8xf32>
    %65 = vector.shape_cast %64 : vector<1x4x8xf32> to vector<4x8xf32>
    %cst_19 = arith.constant dense<0.000000e+00> : vector<4x256xf32>
    %66 = tpu.matmul %65, %63, %cst_19 {dimension_numbers = #tpu.dot_dimension_numbers<[1], [0], [0], [1], [0, 0, 1, 1], [], []>} : vector<4x8xf32>, vector<8x256xf32>, vector<4x256xf32> -> vector<4x256xf32>
    %67 = arith.addf %58, %66 : vector<4x256xf32>
    %c240_i32 = arith.constant 240 : i32
    %68 = tpu.dynamic_rotate %8 by %c240_i32 dim 1 : vector<8x256xf32>, i32 -> vector<8x256xf32>
    %69 = vector.extract_strided_slice %10 {offsets = [7, 0, 0], sizes = [1, 1, 256], strides = [1, 1, 1]} : vector<9x1x256xf32> to vector<1x1x256xf32>
    %70 = vector.shape_cast %69 : vector<1x1x256xf32> to vector<1x256xf32>
    %71 = vector.broadcast %70 : vector<1x256xf32> to vector<8x256xf32>
    %72 = arith.mulf %68, %71 : vector<8x256xf32>
    %73 = vector.extract_strided_slice %9 {offsets = [7, 0, 0], sizes = [1, 4, 8], strides = [1, 1, 1]} : vector<9x4x8xf32> to vector<1x4x8xf32>
    %74 = vector.shape_cast %73 : vector<1x4x8xf32> to vector<4x8xf32>
    %cst_20 = arith.constant dense<0.000000e+00> : vector<4x256xf32>
    %75 = tpu.matmul %74, %72, %cst_20 {dimension_numbers = #tpu.dot_dimension_numbers<[1], [0], [0], [1], [0, 0, 1, 1], [], []>} : vector<4x8xf32>, vector<8x256xf32>, vector<4x256xf32> -> vector<4x256xf32>
    %76 = arith.addf %67, %75 : vector<4x256xf32>
    %c239_i32 = arith.constant 239 : i32
    %77 = tpu.dynamic_rotate %8 by %c239_i32 dim 1 : vector<8x256xf32>, i32 -> vector<8x256xf32>
    %78 = vector.extract_strided_slice %10 {offsets = [8, 0, 0], sizes = [1, 1, 256], strides = [1, 1, 1]} : vector<9x1x256xf32> to vector<1x1x256xf32>
    %79 = vector.shape_cast %78 : vector<1x1x256xf32> to vector<1x256xf32>
    %80 = vector.broadcast %79 : vector<1x256xf32> to vector<8x256xf32>
    %81 = arith.mulf %77, %80 : vector<8x256xf32>
    %82 = vector.extract_strided_slice %9 {offsets = [8, 0, 0], sizes = [1, 4, 8], strides = [1, 1, 1]} : vector<9x4x8xf32> to vector<1x4x8xf32>
    %83 = vector.shape_cast %82 : vector<1x4x8xf32> to vector<4x8xf32>
    %cst_21 = arith.constant dense<0.000000e+00> : vector<4x256xf32>
    %84 = tpu.matmul %83, %81, %cst_21 {dimension_numbers = #tpu.dot_dimension_numbers<[1], [0], [0], [1], [0, 0, 1, 1], [], []>} : vector<4x8xf32>, vector<8x256xf32>, vector<4x256xf32> -> vector<4x256xf32>
    %85 = arith.addf %76, %84 : vector<4x256xf32>
    %c0_22 = arith.constant 0 : index
    %c0_23 = arith.constant 0 : index
    %86 = vector.load %arg5[%c0_22, %c0_23] : memref<4x1xf32, #tpu.memory_space<vmem>>, vector<4x1xf32>
    %87 = vector.broadcast %86 : vector<4x1xf32> to vector<4x256xf32>
    %88 = arith.addf %85, %87 : vector<4x256xf32>
    %cst_24 = arith.constant 0.000000e+00 : f32
    %89 = vector.broadcast %cst_24 : f32 to vector<4x256xf32>
    %90 = arith.maximumf %88, %89 : vector<4x256xf32>
    %c0_25 = arith.constant 0 : index
    %c0_26 = arith.constant 0 : index
    %91 = vector.load %arg6[%c0_25, %c0_26] : memref<4x4xf32, #tpu.memory_space<vmem>>, vector<4x4xf32>
    %cst_27 = arith.constant dense<0.000000e+00> : vector<4x256xf32>
    %92 = tpu.matmul %91, %1, %cst_27 {dimension_numbers = #tpu.dot_dimension_numbers<[1], [0], [0], [1], [0, 0, 1, 1], [], []>} : vector<4x4xf32>, vector<4x256xf32>, vector<4x256xf32> -> vector<4x256xf32>
    %c0_28 = arith.constant 0 : index
    %c0_29 = arith.constant 0 : index
    %93 = vector.load %arg7[%c0_28, %c0_29] : memref<4x1xf32, #tpu.memory_space<vmem>>, vector<4x1xf32>
    %94 = vector.broadcast %93 : vector<4x1xf32> to vector<4x256xf32>
    %95 = arith.addf %92, %94 : vector<4x256xf32>
    %96 = arith.negf %95 : vector<4x256xf32>
    %97 = math.exp %96 : vector<4x256xf32>
    %cst_30 = arith.constant 1.000000e+00 : f32
    %98 = vector.broadcast %cst_30 : f32 to vector<4x256xf32>
    %99 = arith.addf %98, %97 : vector<4x256xf32>
    %100 = arith.divf %98, %99 : vector<4x256xf32>
    %101 = arith.mulf %1, %100 : vector<4x256xf32>
    %102 = arith.addf %101, %90 : vector<4x256xf32>
    %c0_31 = arith.constant 0 : index
    %c0_32 = arith.constant 0 : index
    %c0_33 = arith.constant 0 : index
    %103 = vector.load %arg9[%c0_31, %c0_32, %c0_33] : memref<1x4x256xf32, #tpu.memory_space<vmem>>, vector<1x4x256xf32>
    %104 = vector.shape_cast %103 : vector<1x4x256xf32> to vector<4x256xf32>
    %105 = vector.shape_cast %102 : vector<4x256xf32> to vector<1x4x256xf32>
    tpu.vector_store %arg9[%c0_31, %c0_32, %c0_33], %105 {strides = array<i32>} : memref<1x4x256xf32, #tpu.memory_space<vmem>>, vector<1x4x256xf32>,
    return
  }
  func.func @transform_0(%arg0: i32) -> (i32, i32, i32) {
    %c0_i32 = arith.constant 0 : i32
    %c0_i32_0 = arith.constant 0 : i32
    %c0_i32_1 = arith.constant 0 : i32
    return %arg0, %c0_i32, %c0_i32_0 : i32, i32, i32
  }
  func.func @transform_1(%arg0: i32) -> (i32, i32) {
    %c0_i32 = arith.constant 0 : i32
    %c0_i32_0 = arith.constant 0 : i32
    %c0_i32_1 = arith.constant 0 : i32
    return %c0_i32, %c0_i32_0 : i32, i32
  }
  func.func @transform_2(%arg0: i32) -> (i32, i32) {
    %c0_i32 = arith.constant 0 : i32
    %c0_i32_0 = arith.constant 0 : i32
    %c0_i32_1 = arith.constant 0 : i32
    return %c0_i32, %c0_i32_0 : i32, i32
  }
  func.func @transform_3(%arg0: i32) -> (i32, i32, i32) {
    %c0_i32 = arith.constant 0 : i32
    %c0_i32_0 = arith.constant 0 : i32
    %c0_i32_1 = arith.constant 0 : i32
    %c0_i32_2 = arith.constant 0 : i32
    return %c0_i32, %c0_i32_0, %c0_i32_1 : i32, i32, i32
  }
  func.func @transform_4(%arg0: i32) -> (i32, i32) {
    %c0_i32 = arith.constant 0 : i32
    %c0_i32_0 = arith.constant 0 : i32
    %c0_i32_1 = arith.constant 0 : i32
    return %c0_i32, %c0_i32_0 : i32, i32
  }
  func.func @transform_5(%arg0: i32) -> (i32, i32) {
    %c0_i32 = arith.constant 0 : i32
    %c0_i32_0 = arith.constant 0 : i32
    %c0_i32_1 = arith.constant 0 : i32
    return %c0_i32, %c0_i32_0 : i32, i32
  }
  func.func @transform_6(%arg0: i32) -> (i32, i32) {
    %c0_i32 = arith.constant 0 : i32
    %c0_i32_0 = arith.constant 0 : i32
    %c0_i32_1 = arith.constant 0 : i32
    return %c0_i32, %c0_i32_0 : i32, i32
  }
  func.func @transform_7(%arg0: i32) -> (i32, i32, i32) {
    %c0_i32 = arith.constant 0 : i32
    %c0_i32_0 = arith.constant 0 : i32
    %c0_i32_1 = arith.constant 0 : i32
    %c0_i32_2 = arith.constant 0 : i32
    return %c0_i32, %c0_i32_0, %c0_i32_1 : i32, i32, i32
  }
  func.func @transform_8(%arg0: i32) -> (i32, i32, i32) {
    %c0_i32 = arith.constant 0 : i32
    %c0_i32_0 = arith.constant 0 : i32
    %c0_i32_1 = arith.constant 0 : i32
    return %arg0, %c0_i32, %c0_i32_0 : i32, i32, i32
  }
}

</mosaic_0001>

<llo_original>
// kernel: tpu_custom_call.1
$region0: #{tpu_custom_call.1}
  #allocation0 [shape = 'u32[]', space=smem, size = 0x4, offset = 0x4, fixed_abs, tag = 'smem constant byte address 0x4 - core index']
  #allocation1 [shape = 'u32[144,128]{1,0:T(1,128)}', space=vmem, size = 0x12000, scoped, tag = 'internal scratch']
  %s0 = inlined_call_operand.vmem [shape: f32[2,4,256], index: 0, kind: input, shape index: {}]
  %s1 = inlined_call_operand.vmem [shape: f32[8,4], index: 1, kind: input, shape index: {}]
  %s2 = inlined_call_operand.vmem [shape: f32[8,1], index: 2, kind: input, shape index: {}]
  %s3 = inlined_call_operand.vmem [shape: f32[9,4,8], index: 3, kind: input, shape index: {}]
  %s4 = inlined_call_operand.vmem [shape: f32[4,1], index: 4, kind: input, shape index: {}]
  %s5 = inlined_call_operand.vmem [shape: f32[4,4], index: 5, kind: input, shape index: {}]
  %s6 = inlined_call_operand.vmem [shape: f32[4,1], index: 6, kind: input, shape index: {}]
  %s7 = inlined_call_operand.vmem [shape: f32[9,1,256], index: 7, kind: input, shape index: {}]
  %s8 = inlined_call_operand.hbm [shape: f32[2,4,256], index: 8, kind: output, shape index: {}]
  %s9 = sld [smem:[#allocation0]]
  $region65: #{tpu_custom_call.1} parent=0
    _
  %s11 = ssub.s32 1, %s9
  %s12 = scalar_select 0, %s11, %s9
  $region1: #{tpu_custom_call.1} parent=0
    #allocation2 [shape = 'u8[8192]{0}', space=vmem, size = 0x2000, scoped, tag = 'output window, operand 0']
    #allocation3 [shape = 's32[2]{0}', space=sflag, size = 0x8, scoped, tag = 'scoped memory for tpu_custom_call.1']
    %13 = vsyncpa [#allocation3], 0
    %s14 = scalar_lea.sflag [#allocation3], 1
    %15 = vsyncpa %s14, 0
    loop: start=0, step=1, limit=4
    $region2: #{tpu_custom_call.1} parent=1 // loop_pre_header
      _
    $region3: #{tpu_custom_call.1} parent=1 // loop_header
      %s17 = sphi 0, %s21
      %p18 = scmp.ge.s32.totalorder %s17, 4
      %s27 = sphi 0, %s29
      %s30 = sphi 0, %s27
      %s31 = sphi 0, %s30
      %s47 = sphi 0, %s31
      %s51 = sphi 0, %s51
      %s53 = sphi 0, %s51
      %s54 = sphi 0, %s53
      %s68 = sphi 0, %s54
      %s72 = sphi 0, %s72
      %s74 = sphi 0, %s72
      %s75 = sphi 0, %s74
      %s89 = sphi 0, %s75
      %s93 = sphi 0, %s93
      %s95 = sphi 0, %s93
      %s96 = sphi 0, %s95
      %s110 = sphi 0, %s96
      %s114 = sphi 0, %s114
      %s116 = sphi 0, %s114
      %s117 = sphi 0, %s116
      %s131 = sphi 0, %s117
      %s135 = sphi 0, %s135
      %s137 = sphi 0, %s135
      %s138 = sphi 0, %s137
      %s152 = sphi 0, %s138
      %s156 = sphi 0, %s156
      %s158 = sphi 0, %s156
      %s159 = sphi 0, %s158
      %s173 = sphi 0, %s159
      %s177 = sphi 0, %s177
      %s179 = sphi 0, %s177
      %s180 = sphi 0, %s179
      %s194 = sphi 0, %s180
      %s200 = sphi 0, %s202
      %s203 = sphi 0, %s200
      %s204 = sphi 0, %s203
      %s220 = sphi 0, %s204
    $region4: #{tpu_custom_call.1} parent=1 // loop_header_branch
      %20 = sbr.rel (%p18) target = $region8
    $region5: #{tpu_custom_call.1} parent=1 // loop_body
      %s22 = ssub.s32 %s17, 1
      %s23 = ssub.s32 %s17, 2
      %s24 = sadd.s32 %s17, 1
      %s25 = ssub.s32 %s17, %s24
      %p26 = scmp.eq.s32.totalorder %s25, 0
      %s28 = sadd.s32 %s27, 1
      %s29 = scalar_select %p26, %s27, %s28
      %p32 = pneg %p26
      %p33 = scmp.eq.s32.totalorder %s17, 1
      %p34 = por %p32, %p33
      %p35 = scmp.ne.s32.totalorder %s27, %s30
      %p36 = scmp.eq.s32.totalorder %s17, 0
      %p37 = por %p35, %p36
      %p38 = scmp.ne.s32.totalorder %s27, %s30
      %p39 = scmp.eq.s32.totalorder %s22, 1
      %p40 = por %p38, %p39
      %p41 = scmp.ne.s32.totalorder %s30, %s31
      %p42 = scmp.eq.s32.totalorder %s22, 0
      %p43 = por %p41, %p42
      %p44 = scmp.ne.s32.totalorder %s30, %s31
      %p45 = scmp.eq.s32.totalorder %s23, 1
      %p46 = por %p44, %p45
      %p48 = scmp.ne.s32.totalorder %s31, %s47
      %p49 = scmp.eq.s32.totalorder %s23, 0
      %p50 = por %p48, %p49
      %s52 = sadd.s32 %s51, 1
      %p55 = scmp.eq.s32.totalorder %s17, 1
      %p56 = scmp.ne.s32.totalorder %s51, %s53
      %p57 = scmp.eq.s32.totalorder %s17, 0
      %p58 = por %p56, %p57
      %p59 = scmp.ne.s32.totalorder %s51, %s53
      %p60 = scmp.eq.s32.totalorder %s22, 1
      %p61 = por %p59, %p60
      %p62 = scmp.ne.s32.totalorder %s53, %s54
      %p63 = scmp.eq.s32.totalorder %s22, 0
      %p64 = por %p62, %p63
      %p65 = scmp.ne.s32.totalorder %s53, %s54
      %p66 = scmp.eq.s32.totalorder %s23, 1
      %p67 = por %p65, %p66
      %p69 = scmp.ne.s32.totalorder %s54, %s68
      %p70 = scmp.eq.s32.totalorder %s23, 0
      %p71 = por %p69, %p70
      %s73 = sadd.s32 %s72, 1
      %p76 = scmp.eq.s32.totalorder %s17, 1
      %p77 = scmp.ne.s32.totalorder %s72, %s74
      %p78 = scmp.eq.s32.totalorder %s17, 0
      %p79 = por %p77, %p78
      %p80 = scmp.ne.s32.totalorder %s72, %s74
      %p81 = scmp.eq.s32.totalorder %s22, 1
      %p82 = por %p80, %p81
      %p83 = scmp.ne.s32.totalorder %s74, %s75
      %p84 = scmp.eq.s32.totalorder %s22, 0
      %p85 = por %p83, %p84
      %p86 = scmp.ne.s32.totalorder %s74, %s75
      %p87 = scmp.eq.s32.totalorder %s23, 1
      %p88 = por %p86, %p87
      %p90 = scmp.ne.s32.totalorder %s75, %s89
      %p91 = scmp.eq.s32.totalorder %s23, 0
      %p92 = por %p90, %p91
      %s94 = sadd.s32 %s93, 1
      %p97 = scmp.eq.s32.totalorder %s17, 1
      %p98 = scmp.ne.s32.totalorder %s93, %s95
      %p99 = scmp.eq.s32.totalorder %s17, 0
      %p100 = por %p98, %p99
      %p101 = scmp.ne.s32.totalorder %s93, %s95
      %p102 = scmp.eq.s32.totalorder %s22, 1
      %p103 = por %p101, %p102
      %p104 = scmp.ne.s32.totalorder %s95, %s96
      %p105 = scmp.eq.s32.totalorder %s22, 0
      %p106 = por %p104, %p105
      %p107 = scmp.ne.s32.totalorder %s95, %s96
      %p108 = scmp.eq.s32.totalorder %s23, 1
      %p109 = por %p107, %p108
      %p111 = scmp.ne.s32.totalorder %s96, %s110
      %p112 = scmp.eq.s32.totalorder %s23, 0
      %p113 = por %p111, %p112
      %s115 = sadd.s32 %s114, 1
      %p118 = scmp.eq.s32.totalorder %s17, 1
      %p119 = scmp.ne.s32.totalorder %s114, %s116
      %p120 = scmp.eq.s32.totalorder %s17, 0
      %p121 = por %p119, %p120
      %p122 = scmp.ne.s32.totalorder %s114, %s116
      %p123 = scmp.eq.s32.totalorder %s22, 1
      %p124 = por %p122, %p123
      %p125 = scmp.ne.s32.totalorder %s116, %s117
      %p126 = scmp.eq.s32.totalorder %s22, 0
      %p127 = por %p125, %p126
      %p128 = scmp.ne.s32.totalorder %s116, %s117
      %p129 = scmp.eq.s32.totalorder %s23, 1
      %p130 = por %p128, %p129
      %p132 = scmp.ne.s32.totalorder %s117, %s131
      %p133 = scmp.eq.s32.totalorder %s23, 0
      %p134 = por %p132, %p133
      %s136 = sadd.s32 %s135, 1
      %p139 = scmp.eq.s32.totalorder %s17, 1
      %p140 = scmp.ne.s32.totalorder %s135, %s137
      %p141 = scmp.eq.s32.totalorder %s17, 0
      %p142 = por %p140, %p141
      %p143 = scmp.ne.s32.totalorder %s135, %s137
      %p144 = scmp.eq.s32.totalorder %s22, 1
      %p145 = por %p143, %p144
      %p146 = scmp.ne.s32.totalorder %s137, %s138
      %p147 = scmp.eq.s32.totalorder %s22, 0
      %p148 = por %p146, %p147
      %p149 = scmp.ne.s32.totalorder %s137, %s138
      %p150 = scmp.eq.s32.totalorder %s23, 1
      %p151 = por %p149, %p150
      %p153 = scmp.ne.s32.totalorder %s138, %s152
      %p154 = scmp.eq.s32.totalorder %s23, 0
      %p155 = por %p153, %p154
      %s157 = sadd.s32 %s156, 1
      %p160 = scmp.eq.s32.totalorder %s17, 1
      %p161 = scmp.ne.s32.totalorder %s156, %s158
      %p162 = scmp.eq.s32.totalorder %s17, 0
      %p163 = por %p161, %p162
      %p164 = scmp.ne.s32.totalorder %s156, %s158
      %p165 = scmp.eq.s32.totalorder %s22, 1
      %p166 = por %p164, %p165
      %p167 = scmp.ne.s32.totalorder %s158, %s159
      %p168 = scmp.eq.s32.totalorder %s22, 0
      %p169 = por %p167, %p168
      %p170 = scmp.ne.s32.totalorder %s158, %s159
      %p171 = scmp.eq.s32.totalorder %s23, 1
      %p172 = por %p170, %p171
      %p174 = scmp.ne.s32.totalorder %s159, %s173
      %p175 = scmp.eq.s32.totalorder %s23, 0
      %p176 = por %p174, %p175
      %s178 = sadd.s32 %s177, 1
      %p181 = scmp.eq.s32.totalorder %s17, 1
      %p182 = scmp.ne.s32.totalorder %s177, %s179
      %p183 = scmp.eq.s32.totalorder %s17, 0
      %p184 = por %p182, %p183
      %p185 = scmp.ne.s32.totalorder %s177, %s179
      %p186 = scmp.eq.s32.totalorder %s22, 1
      %p187 = por %p185, %p186
      %p188 = scmp.ne.s32.totalorder %s179, %s180
      %p189 = scmp.eq.s32.totalorder %s22, 0
      %p190 = por %p188, %p189
      %p191 = scmp.ne.s32.totalorder %s179, %s180
      %p192 = scmp.eq.s32.totalorder %s23, 1
      %p193 = por %p191, %p192
      %p195 = scmp.ne.s32.totalorder %s180, %s194
      %p196 = scmp.eq.s32.totalorder %s23, 0
      %p197 = por %p195, %p196
      %s198 = ssub.s32 %s17, %s24
      %p199 = scmp.eq.s32.totalorder %s198, 0
      %s201 = sadd.s32 %s200, 1
      %s202 = scalar_select %p199, %s200, %s201
      %p205 = pneg %p199
      %p206 = scmp.eq.s32.totalorder %s17, 1
      %p207 = por %p205, %p206
      %p208 = scmp.ne.s32.totalorder %s200, %s203
      %p209 = scmp.eq.s32.totalorder %s17, 0
      %p210 = por %p208, %p209
      %p211 = scmp.ne.s32.totalorder %s200, %s203
      %p212 = scmp.eq.s32.totalorder %s22, 1
      %p213 = por %p211, %p212
      %p214 = scmp.ne.s32.totalorder %s203, %s204
      %p215 = scmp.eq.s32.totalorder %s22, 0
      %p216 = por %p214, %p215
      %p217 = scmp.ne.s32.totalorder %s203, %s204
      %p218 = scmp.eq.s32.totalorder %s23, 1
      %p219 = por %p217, %p218
      %p221 = scmp.ne.s32.totalorder %s204, %s220
      %p222 = scmp.eq.s32.totalorder %s23, 0
      %p223 = por %p221, %p222
      %p224 = scmp.le.s32.totalorder 1, %s17
      %p225 = scmp.lt.s32.totalorder %s17, 3
      %p226 = pnand %p224, %p225
      %p227 = pneg %p226
      // Predicated region
      $region9: #{tpu_custom_call.1} parent=5 // pred_check
        _
      $region10: #{tpu_custom_call.1} parent=5 // pred_check_branch
        %229 = sbr.rel (%p226) target = $region12
      $region11: #{tpu_custom_call.1} parent=5 // pred_region
        %s230 = ssub.s32 %s17, 1
        // Predicated region
        $region13: #{tpu_custom_call.1} parent=11 // pred_check
          %p231 = pneg %p64
        $region14: #{tpu_custom_call.1} parent=11 // pred_check_branch
          %233 = sbr.rel (%p231) target = $region16
        $region15: #{tpu_custom_call.1} parent=11 // pred_region
          _
        $region16: #{tpu_custom_call.1} parent=11 // pred_fallthru
          _
        // Predicated region
        $region17: #{tpu_custom_call.1} parent=11 // pred_check
          %p234 = pneg %p85
        $region18: #{tpu_custom_call.1} parent=11 // pred_check_branch
          %236 = sbr.rel (%p234) target = $region20
        $region19: #{tpu_custom_call.1} parent=11 // pred_region
          _
        $region20: #{tpu_custom_call.1} parent=11 // pred_fallthru
          _
        // Predicated region
        $region21: #{tpu_custom_call.1} parent=11 // pred_check
          %p237 = pneg %p106
        $region22: #{tpu_custom_call.1} parent=11 // pred_check_branch
          %239 = sbr.rel (%p237) target = $region24
        $region23: #{tpu_custom_call.1} parent=11 // pred_region
          _
        $region24: #{tpu_custom_call.1} parent=11 // pred_fallthru
          _
        // Predicated region
        $region25: #{tpu_custom_call.1} parent=11 // pred_check
          %p240 = pneg %p127
        $region26: #{tpu_custom_call.1} parent=11 // pred_check_branch
          %242 = sbr.rel (%p240) target = $region28
        $region27: #{tpu_custom_call.1} parent=11 // pred_region
          _
        $region28: #{tpu_custom_call.1} parent=11 // pred_fallthru
          _
        // Predicated region
        $region29: #{tpu_custom_call.1} parent=11 // pred_check
          %p243 = pneg %p148
        $region30: #{tpu_custom_call.1} parent=11 // pred_check_branch
          %245 = sbr.rel (%p243) target = $region32
        $region31: #{tpu_custom_call.1} parent=11 // pred_region
          _
        $region32: #{tpu_custom_call.1} parent=11 // pred_fallthru
          _
        // Predicated region
        $region33: #{tpu_custom_call.1} parent=11 // pred_check
          %p246 = pneg %p169
        $region34: #{tpu_custom_call.1} parent=11 // pred_check_branch
          %248 = sbr.rel (%p246) target = $region36
        $region35: #{tpu_custom_call.1} parent=11 // pred_region
          _
        $region36: #{tpu_custom_call.1} parent=11 // pred_fallthru
          _
        // Predicated region
        $region37: #{tpu_custom_call.1} parent=11 // pred_check
          %p249 = pneg %p190
        $region38: #{tpu_custom_call.1} parent=11 // pred_check_branch
          %251 = sbr.rel (%p249) target = $region40
        $region39: #{tpu_custom_call.1} parent=11 // pred_region
          _
        $region40: #{tpu_custom_call.1} parent=11 // pred_fallthru
          _
      $region12: #{tpu_custom_call.1} parent=5 // pred_fallthru
        _
      %p252 = scmp.lt.s32.totalorder %s17, 2
      // Predicated region
      $region41: #{tpu_custom_call.1} parent=5 // pred_check
        %p253 = pneg %p252
      $region42: #{tpu_custom_call.1} parent=5 // pred_check_branch
        %255 = sbr.rel (%p253) target = $region44
      $region43: #{tpu_custom_call.1} parent=5 // pred_region
        // Predicated region
        $region45: #{tpu_custom_call.1} parent=43 // pred_check
          %p256 = pneg %p37
        $region46: #{tpu_custom_call.1} parent=43 // pred_check_branch
          %258 = sbr.rel (%p256) target = $region48
        $region47: #{tpu_custom_call.1} parent=43 // pred_region
          %p259 = scmp.lt.s32.totalorder %s17, 1
          %s260 = scalar_select %p259, %s17, 1
          %s261 = smul.addr %s260, 2
          %s262 = smul.addr %s261, 4
          %s263 = scalar_lea.vmem %s0, %s262
        $region48: #{tpu_custom_call.1} parent=43 // pred_fallthru
          _
      $region44: #{tpu_custom_call.1} parent=5 // pred_fallthru
        _
      %p264 = scmp.le.s32.totalorder 1, %s17
      %p265 = scmp.lt.s32.totalorder %s17, 3
      %p266 = pnand %p264, %p265
      %p267 = pneg %p266
      // Predicated region
      $region49: #{tpu_custom_call.1} parent=5 // pred_check
        _
      $region50: #{tpu_custom_call.1} parent=5 // pred_check_branch
        %269 = sbr.rel (%p266) target = $region52
      $region51: #{tpu_custom_call.1} parent=5 // pred_region
        %s270 = ssub.s32 %s17, 1
        %p271 = scmp.lt.s32.totalorder %s22, 1
        %s272 = scalar_select %p271, %s22, 1
        %s273 = smul.addr %s272, 2
        %s274 = smul.addr %s273, 4
        %s275 = scalar_lea.vmem %s0, %s274
        %p276 = pneg %p43
        %p277 = pneg %p40
        %p278 = pneg %p64
        %p279 = pneg %p61
        %p280 = pneg %p85
        %p281 = pneg %p82
        %p282 = pneg %p106
        %p283 = pneg %p103
        %p284 = pneg %p127
        %p285 = pneg %p124
        %p286 = pneg %p148
        %p287 = pneg %p145
        %p288 = pneg %p169
        %p289 = pneg %p166
        %p290 = pneg %p190
        %p291 = pneg %p187
        %p292 = pneg %p216
        %p293 = pneg %p213
        %s294 = sand.u32 %s203, 1
        %s295 = scalar_lea.sflag [#allocation3], %s294
        %s296 = sand.u32 %s203, 1
        %s297 = smul.addr %s296, 8
        %s298 = scalar_lea.vmem [#allocation2], %s297
        %p299 = scmp.lt.s32.totalorder %s22, 1
        %s300 = scalar_select %p299, %s22, 1
        %s301 = smul.addr %s300, 2
        %s302 = smul.addr %s301, 4
        %s303 = scalar_lea.vmem %s0, %s302
        %v304 = vld [vmem:[%s303] sm:$0xff]
        %v305 = vld [vmem:[%s1] sm:$0xff]
        %v306 = vld [vmem:[%s2] sm:$0xff]
        %308 = vset.pattern.permute.xlu0 0
        %309 = vperm.xlu0 %308, %v306
        %v310 = vpop.permute.xlu0 %309
        %v313 = vcombine.high %v304, %v304
        %vm314 = vcmask 31744
        %v316 = vsel %vm314, %v305, 0
        %vm318 = vcmask 1043456
        %v319 = vsel %vm318, %v304, 0
        %v321 = vsel %vm318, %v313, 0
        %323 = vmatprep.subr.mxu0 %v321
        %324 = vmatpush1.msra.mxu0 %v319
        %325 = vmatprep.subr.mxu0 0.0
        %326 = vmatpush1.msra.mxu0 0.0
        %327 = vmatprep.subr.mxu0 0.0
        %328 = vmatpush1.msra.mxu0 0.0
        %329 = vmatprep.subr.mxu0 0.0
        %330 = vmatpush1.msra.mxu0 0.0
        %331 = vmatprep.subr.mxu0 0.0
        %332 = vmatpush1.msra.mxu0 0.0
        %333 = vmatprep.subr.mxu0 0.0
        %334 = vmatpush1.msra.mxu0 0.0
        %335 = vmatprep.subr.mxu0 0.0
        %336 = vmatpush1.msra.mxu0 0.0
        %337 = vmatprep.subr.mxu0 0.0
        %338 = vmatpush1.msra.mxu0 0.0
        %339 = vmatprep.subr.mxu0 0.0
        %340 = vmatpush1.msra.mxu0 0.0
        %341 = vmatprep.subr.mxu0 0.0
        %342 = vmatpush1.msra.mxu0 0.0
        %343 = vmatprep.subr.mxu0 0.0
        %344 = vmatpush1.msra.mxu0 0.0
        %345 = vmatprep.subr.mxu0 0.0
        %346 = vmatpush1.msra.mxu0 0.0
        %347 = vmatprep.subr.mxu0 0.0
        %348 = vmatpush1.msra.mxu0 0.0
        %349 = vmatprep.subr.mxu0 0.0
        %350 = vmatpush1.msra.mxu0 0.0
        %351 = vmatprep.subr.mxu0 0.0
        %352 = vmatpush1.msra.mxu0 0.0
        %353 = vmatprep.subr.mxu0 0.0
        %354 = vmatpush1.msra.mxu0 0.0
        %355 = vmatprep.subr.mxu0 0.0
        %356 = vmatpush1.msra.mxu0 0.0
        %357 = vmatprep.subr.mxu0 0.0
        %358 = vmatpush1.msra.mxu0 0.0
        %359 = vmatprep.subr.mxu0 0.0
        %360 = vmatpush1.msra.mxu0 0.0
        %361 = vmatprep.subr.mxu0 0.0
        %362 = vmatpush1.msra.mxu0 0.0
        %363 = vmatprep.subr.mxu0 0.0
        %364 = vmatpush1.msra.mxu0 0.0
        %365 = vmatprep.subr.mxu0 0.0
        %366 = vmatpush1.msra.mxu0 0.0
        %367 = vmatprep.subr.mxu0 0.0
        %368 = vmatpush1.msra.mxu0 0.0
        %369 = vmatprep.subr.mxu0 0.0
        %370 = vmatpush1.msra.mxu0 0.0
        %371 = vmatprep.subr.mxu0 0.0
        %372 = vmatpush1.msra.mxu0 0.0
        %373 = vmatprep.subr.mxu0 0.0
        %374 = vmatpush1.msra.mxu0 0.0
        %375 = vmatprep.subr.mxu0 0.0
        %376 = vmatpush1.msra.mxu0 0.0
        %377 = vmatprep.subr.mxu0 0.0
        %378 = vmatpush1.msra.mxu0 0.0
        %379 = vmatprep.subr.mxu0 0.0
        %380 = vmatpush1.msra.mxu0 0.0
        %381 = vmatprep.subr.mxu0 0.0
        %382 = vmatpush1.msra.mxu0 0.0
        %383 = vmatprep.subr.mxu0 0.0
        %384 = vmatpush1.msra.mxu0 0.0
        %385 = vmatprep.subr.mxu0 0.0
        %386 = vmatpush1.msra.mxu0 0.0
        %387 = vmatprep.mubr.f32.mxu0 0.0
        %388 = vmatmul.mubr.f32.gmra.mrb[0].mxu0 %v316
        %v389 = vpop.f32.mrb[0].mxu0
        %v390 = vadd.f32 %v310, %v389
        %v391 = vpop.f32.mrb[0].mxu0
        %v392 = vadd.f32 %v310, %v391
        %393 = vdwg.mxu0
        %v394 = vmax.f32 %v390, 0.0
        %v395 = vmax.f32 %v392, 0.0
        %v396 = vld [vmem:[%s3] sm:$0xf]
        %v397 = vld [vmem:[%s3 + $0x4] sm:$0xf]
        %v398 = vld [vmem:[%s3 + $0x8] sm:$0xf]
        %v399 = vld [vmem:[%s3 + $0xc] sm:$0xf]
        %v400 = vld [vmem:[%s3 + $0x10] sm:$0xf]
        %v401 = vld [vmem:[%s3 + $0x14] sm:$0xf]
        %v402 = vld [vmem:[%s3 + $0x18] sm:$0xf]
        %v403 = vld [vmem:[%s3 + $0x1c] sm:$0xf]
        %v404 = vld [vmem:[%s3 + $0x20] sm:$0xf]
        %v405 = vld [vmem:[%s7] sm:$0x3]
        %v406 = vld [vmem:[%s7 + $0x2] sm:$0x3]
        %v407 = vld [vmem:[%s7 + $0x4] sm:$0x3]
        %v408 = vld [vmem:[%s7 + $0x6] sm:$0x3]
        %v409 = vld [vmem:[%s7 + $0xa] sm:$0x3]
        %v410 = vld [vmem:[%s7 + $0xc] sm:$0x3]
        %v411 = vld [vmem:[%s7 + $0xe] sm:$0x3]
        %v412 = vld [vmem:[%s7 + $0x10] sm:$0x3]
        %413 = vrot.lane.b32.xlu0 %v394, 17
        %v414 = vpop.permute.xlu0 %413
        %415 = vrot.lane.b32.xlu0 %v395, 17
        %v416 = vpop.permute.xlu0 %415
        %v417 = vlaneseq
        %v418 = vand.u32 %v417, 127
        %vm419 = vcmp.lt.s32.totalorder %v418, 17
        %v420 = vsel %vm419, %v414, %v416
        %v421 = vsel %vm419, %v416, %v414
        %v423 = vlaneseq
        %v424 = vshrl.u32 %v423, 7
        %v425 = vsub.s32 0, %v424
        %v426 = vrot.slane %v405, %v425
        %v427 = vlaneseq
        %v428 = vshrl.u32 %v427, 7
        %v429 = vsub.s32 1, %v428
        %v430 = vrot.slane %v405, %v429
        %v433 = vmul.f32 %v421, %v426
        %v434 = vmul.f32 %v420, %v430
        %435 = vrot.lane.b32.xlu0 %v394, 16
        %v436 = vpop.permute.xlu0 %435
        %437 = vrot.lane.b32.xlu0 %v395, 16
        %v438 = vpop.permute.xlu0 %437
        %vm439 = vcmp.lt.s32.totalorder %v418, 16
        %v440 = vsel %vm439, %v436, %v438
        %v441 = vsel %vm439, %v438, %v436
        %v443 = vlaneseq
        %v444 = vshrl.u32 %v443, 7
        %v445 = vsub.s32 0, %v444
        %v446 = vrot.slane %v406, %v445
        %v447 = vlaneseq
        %v448 = vshrl.u32 %v447, 7
        %v449 = vsub.s32 1, %v448
        %v450 = vrot.slane %v406, %v449
        %v453 = vmul.f32 %v441, %v446
        %v454 = vmul.f32 %v440, %v450
        %vm455 = vcmask 64512
        %v457 = vsel %vm455, %v397, 0
        %459 = vmatprep.subr.mxu0 %v454
        %460 = vmatpush1.msra.mxu0 %v453
        %461 = vmatprep.subr.mxu0 0.0
        %462 = vmatpush1.msra.mxu0 0.0
        %463 = vmatprep.subr.mxu0 0.0
        %464 = vmatpush1.msra.mxu0 0.0
        %465 = vmatprep.subr.mxu0 0.0
        %466 = vmatpush1.msra.mxu0 0.0
        %467 = vmatprep.subr.mxu0 0.0
        %468 = vmatpush1.msra.mxu0 0.0
        %469 = vmatprep.subr.mxu0 0.0
        %470 = vmatpush1.msra.mxu0 0.0
        %471 = vmatprep.subr.mxu0 0.0
        %472 = vmatpush1.msra.mxu0 0.0
        %473 = vmatprep.subr.mxu0 0.0
        %474 = vmatpush1.msra.mxu0 0.0
        %475 = vmatprep.subr.mxu0 0.0
        %476 = vmatpush1.msra.mxu0 0.0
        %477 = vmatprep.subr.mxu0 0.0
        %478 = vmatpush1.msra.mxu0 0.0
        %479 = vmatprep.subr.mxu0 0.0
        %480 = vmatpush1.msra.mxu0 0.0
        %481 = vmatprep.subr.mxu0 0.0
        %482 = vmatpush1.msra.mxu0 0.0
        %483 = vmatprep.subr.mxu0 0.0
        %484 = vmatpush1.msra.mxu0 0.0
        %485 = vmatprep.subr.mxu0 0.0
        %486 = vmatpush1.msra.mxu0 0.0
        %487 = vmatprep.subr.mxu0 0.0
        %488 = vmatpush1.msra.mxu0 0.0
        %489 = vmatprep.subr.mxu0 0.0
        %490 = vmatpush1.msra.mxu0 0.0
        %491 = vmatprep.subr.mxu0 0.0
        %492 = vmatpush1.msra.mxu0 0.0
        %493 = vmatprep.subr.mxu0 0.0
        %494 = vmatpush1.msra.mxu0 0.0
        %495 = vmatprep.subr.mxu0 0.0
        %496 = vmatpush1.msra.mxu0 0.0
        %497 = vmatprep.subr.mxu0 0.0
        %498 = vmatpush1.msra.mxu0 0.0
        %499 = vmatprep.subr.mxu0 0.0
        %500 = vmatpush1.msra.mxu0 0.0
        %501 = vmatprep.subr.mxu0 0.0
        %502 = vmatpush1.msra.mxu0 0.0
        %503 = vmatprep.subr.mxu0 0.0
        %504 = vmatpush1.msra.mxu0 0.0
        %505 = vmatprep.subr.mxu0 0.0
        %506 = vmatpush1.msra.mxu0 0.0
        %507 = vmatprep.subr.mxu0 0.0
        %508 = vmatpush1.msra.mxu0 0.0
        %509 = vmatprep.subr.mxu0 0.0
        %510 = vmatpush1.msra.mxu0 0.0
        %511 = vmatprep.subr.mxu0 0.0
        %512 = vmatpush1.msra.mxu0 0.0
        %513 = vmatprep.subr.mxu0 0.0
        %514 = vmatpush1.msra.mxu0 0.0
        %515 = vmatprep.subr.mxu0 0.0
        %516 = vmatpush1.msra.mxu0 0.0
        %517 = vmatprep.subr.mxu0 0.0
        %518 = vmatpush1.msra.mxu0 0.0
        %519 = vmatprep.subr.mxu0 0.0
        %520 = vmatpush1.msra.mxu0 0.0
        %521 = vmatprep.subr.mxu0 0.0
        %522 = vmatpush1.msra.mxu0 0.0
        %523 = vmatprep.mubr.f32.mxu0 0.0
        %524 = vmatmul.mubr.f32.gmra.mrb[0].mxu0 %v457
        %v525 = vpop.f32.mrb[0].mxu0
        %v526 = vadd.f32 0.0, %v525
        %v527 = vpop.f32.mrb[0].mxu0
        %v528 = vadd.f32 0.0, %v527
        %529 = vdwg.mxu0
        %v531 = vsel %vm455, %v396, 0
        %533 = vmatprep.subr.mxu0 %v434
        %534 = vmatpush1.msra.mxu0 %v433
        %535 = vmatprep.subr.mxu0 0.0
        %536 = vmatpush1.msra.mxu0 0.0
        %537 = vmatprep.subr.mxu0 0.0
        %538 = vmatpush1.msra.mxu0 0.0
        %539 = vmatprep.subr.mxu0 0.0
        %540 = vmatpush1.msra.mxu0 0.0
        %541 = vmatprep.subr.mxu0 0.0
        %542 = vmatpush1.msra.mxu0 0.0
        %543 = vmatprep.subr.mxu0 0.0
        %544 = vmatpush1.msra.mxu0 0.0
        %545 = vmatprep.subr.mxu0 0.0
        %546 = vmatpush1.msra.mxu0 0.0
        %547 = vmatprep.subr.mxu0 0.0
        %548 = vmatpush1.msra.mxu0 0.0
        %549 = vmatprep.subr.mxu0 0.0
        %550 = vmatpush1.msra.mxu0 0.0
        %551 = vmatprep.subr.mxu0 0.0
        %552 = vmatpush1.msra.mxu0 0.0
        %553 = vmatprep.subr.mxu0 0.0
        %554 = vmatpush1.msra.mxu0 0.0
        %555 = vmatprep.subr.mxu0 0.0
        %556 = vmatpush1.msra.mxu0 0.0
        %557 = vmatprep.subr.mxu0 0.0
        %558 = vmatpush1.msra.mxu0 0.0
        %559 = vmatprep.subr.mxu0 0.0
        %560 = vmatpush1.msra.mxu0 0.0
        %561 = vmatprep.subr.mxu0 0.0
        %562 = vmatpush1.msra.mxu0 0.0
        %563 = vmatprep.subr.mxu0 0.0
        %564 = vmatpush1.msra.mxu0 0.0
        %565 = vmatprep.subr.mxu0 0.0
        %566 = vmatpush1.msra.mxu0 0.0
        %567 = vmatprep.subr.mxu0 0.0
        %568 = vmatpush1.msra.mxu0 0.0
        %569 = vmatprep.subr.mxu0 0.0
        %570 = vmatpush1.msra.mxu0 0.0
        %571 = vmatprep.subr.mxu0 0.0
        %572 = vmatpush1.msra.mxu0 0.0
        %573 = vmatprep.subr.mxu0 0.0
        %574 = vmatpush1.msra.mxu0 0.0
        %575 = vmatprep.subr.mxu0 0.0
        %576 = vmatpush1.msra.mxu0 0.0
        %577 = vmatprep.subr.mxu0 0.0
        %578 = vmatpush1.msra.mxu0 0.0
        %579 = vmatprep.subr.mxu0 0.0
        %580 = vmatpush1.msra.mxu0 0.0
        %581 = vmatprep.subr.mxu0 0.0
        %582 = vmatpush1.msra.mxu0 0.0
        %583 = vmatprep.subr.mxu0 0.0
        %584 = vmatpush1.msra.mxu0 0.0
        %585 = vmatprep.subr.mxu0 0.0
        %586 = vmatpush1.msra.mxu0 0.0
        %587 = vmatprep.subr.mxu0 0.0
        %588 = vmatpush1.msra.mxu0 0.0
        %589 = vmatprep.subr.mxu0 0.0
        %590 = vmatpush1.msra.mxu0 0.0
        %591 = vmatprep.subr.mxu0 0.0
        %592 = vmatpush1.msra.mxu0 0.0
        %593 = vmatprep.subr.mxu0 0.0
        %594 = vmatpush1.msra.mxu0 0.0
        %595 = vmatprep.subr.mxu0 0.0
        %596 = vmatpush1.msra.mxu0 0.0
        %597 = vmatprep.mubr.f32.mxu0 0.0
        %598 = vmatmul.mubr.f32.gmra.mrb[0].mxu0 %v531
        %v599 = vpop.f32.mrb[0].mxu0
        %v600 = vadd.f32 %v526, %v599
        %v601 = vpop.f32.mrb[0].mxu0
        %v602 = vadd.f32 %v528, %v601
        %603 = vdwg.mxu0
        %604 = vrot.lane.b32.xlu0 %v394, 15
        %v605 = vpop.permute.xlu0 %604
        %606 = vrot.lane.b32.xlu0 %v395, 15
        %v607 = vpop.permute.xlu0 %606
        %vm608 = vcmp.lt.s32.totalorder %v418, 15
        %v609 = vsel %vm608, %v605, %v607
        %v610 = vsel %vm608, %v607, %v605
        %v612 = vlaneseq
        %v613 = vshrl.u32 %v612, 7
        %v614 = vsub.s32 0, %v613
        %v615 = vrot.slane %v407, %v614
        %v616 = vlaneseq
        %v617 = vshrl.u32 %v616, 7
        %v618 = vsub.s32 1, %v617
        %v619 = vrot.slane %v407, %v618
        %v622 = vmul.f32 %v610, %v615
        %v623 = vmul.f32 %v609, %v619
        %v625 = vsel %vm455, %v398, 0
        %627 = vmatprep.subr.mxu0 %v623
        %628 = vmatpush1.msra.mxu0 %v622
        %629 = vmatprep.subr.mxu0 0.0
        %630 = vmatpush1.msra.mxu0 0.0
        %631 = vmatprep.subr.mxu0 0.0
        %632 = vmatpush1.msra.mxu0 0.0
        %633 = vmatprep.subr.mxu0 0.0
        %634 = vmatpush1.msra.mxu0 0.0
        %635 = vmatprep.subr.mxu0 0.0
        %636 = vmatpush1.msra.mxu0 0.0
        %637 = vmatprep.subr.mxu0 0.0
        %638 = vmatpush1.msra.mxu0 0.0
        %639 = vmatprep.subr.mxu0 0.0
        %640 = vmatpush1.msra.mxu0 0.0
        %641 = vmatprep.subr.mxu0 0.0
        %642 = vmatpush1.msra.mxu0 0.0
        %643 = vmatprep.subr.mxu0 0.0
        %644 = vmatpush1.msra.mxu0 0.0
        %645 = vmatprep.subr.mxu0 0.0
        %646 = vmatpush1.msra.mxu0 0.0
        %647 = vmatprep.subr.mxu0 0.0
        %648 = vmatpush1.msra.mxu0 0.0
        %649 = vmatprep.subr.mxu0 0.0
        %650 = vmatpush1.msra.mxu0 0.0
        %651 = vmatprep.subr.mxu0 0.0
        %652 = vmatpush1.msra.mxu0 0.0
        %653 = vmatprep.subr.mxu0 0.0
        %654 = vmatpush1.msra.mxu0 0.0
        %655 = vmatprep.subr.mxu0 0.0
        %656 = vmatpush1.msra.mxu0 0.0
        %657 = vmatprep.subr.mxu0 0.0
        %658 = vmatpush1.msra.mxu0 0.0
        %659 = vmatprep.subr.mxu0 0.0
        %660 = vmatpush1.msra.mxu0 0.0
        %661 = vmatprep.subr.mxu0 0.0
        %662 = vmatpush1.msra.mxu0 0.0
        %663 = vmatprep.subr.mxu0 0.0
        %664 = vmatpush1.msra.mxu0 0.0
        %665 = vmatprep.subr.mxu0 0.0
        %666 = vmatpush1.msra.mxu0 0.0
        %667 = vmatprep.subr.mxu0 0.0
        %668 = vmatpush1.msra.mxu0 0.0
        %669 = vmatprep.subr.mxu0 0.0
        %670 = vmatpush1.msra.mxu0 0.0
        %671 = vmatprep.subr.mxu0 0.0
        %672 = vmatpush1.msra.mxu0 0.0
        %673 = vmatprep.subr.mxu0 0.0
        %674 = vmatpush1.msra.mxu0 0.0
        %675 = vmatprep.subr.mxu0 0.0
        %676 = vmatpush1.msra.mxu0 0.0
        %677 = vmatprep.subr.mxu0 0.0
        %678 = vmatpush1.msra.mxu0 0.0
        %679 = vmatprep.subr.mxu0 0.0
        %680 = vmatpush1.msra.mxu0 0.0
        %681 = vmatprep.subr.mxu0 0.0
        %682 = vmatpush1.msra.mxu0 0.0
        %683 = vmatprep.subr.mxu0 0.0
        %684 = vmatpush1.msra.mxu0 0.0
        %685 = vmatprep.subr.mxu0 0.0
        %686 = vmatpush1.msra.mxu0 0.0
        %687 = vmatprep.subr.mxu0 0.0
        %688 = vmatpush1.msra.mxu0 0.0
        %689 = vmatprep.subr.mxu0 0.0
        %690 = vmatpush1.msra.mxu0 0.0
        %691 = vmatprep.mubr.f32.mxu0 0.0
        %692 = vmatmul.mubr.f32.gmra.mrb[0].mxu0 %v625
        %v693 = vpop.f32.mrb[0].mxu0
        %v694 = vadd.f32 0.0, %v693
        %v695 = vpop.f32.mrb[0].mxu0
        %v696 = vadd.f32 0.0, %v695
        %697 = vdwg.mxu0
        %v698 = vadd.f32 %v600, %v694
        %v699 = vadd.f32 %v602, %v696
        %700 = vrot.lane.b32.xlu0 %v394, 1
        %v701 = vpop.permute.xlu0 %700
        %702 = vrot.lane.b32.xlu0 %v395, 1
        %v703 = vpop.permute.xlu0 %702
        %vm704 = vcmp.lt.s32.totalorder %v418, 1
        %v705 = vsel %vm704, %v701, %v703
        %v706 = vsel %vm704, %v703, %v701
        %v708 = vlaneseq
        %v709 = vshrl.u32 %v708, 7
        %v710 = vsub.s32 0, %v709
        %v711 = vrot.slane %v408, %v710
        %v712 = vlaneseq
        %v713 = vshrl.u32 %v712, 7
        %v714 = vsub.s32 1, %v713
        %v715 = vrot.slane %v408, %v714
        %v718 = vmul.f32 %v706, %v711
        %v719 = vmul.f32 %v705, %v715
        %v721 = vsel %vm455, %v399, 0
        %723 = vmatprep.subr.mxu0 %v719
        %724 = vmatpush1.msra.mxu0 %v718
        %725 = vmatprep.subr.mxu0 0.0
        %726 = vmatpush1.msra.mxu0 0.0
        %727 = vmatprep.subr.mxu0 0.0
        %728 = vmatpush1.msra.mxu0 0.0
        %729 = vmatprep.subr.mxu0 0.0
        %730 = vmatpush1.msra.mxu0 0.0
        %731 = vmatprep.subr.mxu0 0.0
        %732 = vmatpush1.msra.mxu0 0.0
        %733 = vmatprep.subr.mxu0 0.0
        %734 = vmatpush1.msra.mxu0 0.0
        %735 = vmatprep.subr.mxu0 0.0
        %736 = vmatpush1.msra.mxu0 0.0
        %737 = vmatprep.subr.mxu0 0.0
        %738 = vmatpush1.msra.mxu0 0.0
        %739 = vmatprep.subr.mxu0 0.0
        %740 = vmatpush1.msra.mxu0 0.0
        %741 = vmatprep.subr.mxu0 0.0
        %742 = vmatpush1.msra.mxu0 0.0
        %743 = vmatprep.subr.mxu0 0.0
        %744 = vmatpush1.msra.mxu0 0.0
        %745 = vmatprep.subr.mxu0 0.0
        %746 = vmatpush1.msra.mxu0 0.0
        %747 = vmatprep.subr.mxu0 0.0
        %748 = vmatpush1.msra.mxu0 0.0
        %749 = vmatprep.subr.mxu0 0.0
        %750 = vmatpush1.msra.mxu0 0.0
        %751 = vmatprep.subr.mxu0 0.0
        %752 = vmatpush1.msra.mxu0 0.0
        %753 = vmatprep.subr.mxu0 0.0
        %754 = vmatpush1.msra.mxu0 0.0
        %755 = vmatprep.subr.mxu0 0.0
        %756 = vmatpush1.msra.mxu0 0.0
        %757 = vmatprep.subr.mxu0 0.0
        %758 = vmatpush1.msra.mxu0 0.0
        %759 = vmatprep.subr.mxu0 0.0
        %760 = vmatpush1.msra.mxu0 0.0
        %761 = vmatprep.subr.mxu0 0.0
        %762 = vmatpush1.msra.mxu0 0.0
        %763 = vmatprep.subr.mxu0 0.0
        %764 = vmatpush1.msra.mxu0 0.0
        %765 = vmatprep.subr.mxu0 0.0
        %766 = vmatpush1.msra.mxu0 0.0
        %767 = vmatprep.subr.mxu0 0.0
        %768 = vmatpush1.msra.mxu0 0.0
        %769 = vmatprep.subr.mxu0 0.0
        %770 = vmatpush1.msra.mxu0 0.0
        %771 = vmatprep.subr.mxu0 0.0
        %772 = vmatpush1.msra.mxu0 0.0
        %773 = vmatprep.subr.mxu0 0.0
        %774 = vmatpush1.msra.mxu0 0.0
        %775 = vmatprep.subr.mxu0 0.0
        %776 = vmatpush1.msra.mxu0 0.0
        %777 = vmatprep.subr.mxu0 0.0
        %778 = vmatpush1.msra.mxu0 0.0
        %779 = vmatprep.subr.mxu0 0.0
        %780 = vmatpush1.msra.mxu0 0.0
        %781 = vmatprep.subr.mxu0 0.0
        %782 = vmatpush1.msra.mxu0 0.0
        %783 = vmatprep.subr.mxu0 0.0
        %784 = vmatpush1.msra.mxu0 0.0
        %785 = vmatprep.subr.mxu0 0.0
        %786 = vmatpush1.msra.mxu0 0.0
        %787 = vmatprep.mubr.f32.mxu0 0.0
        %788 = vmatmul.mubr.f32.gmra.mrb[0].mxu0 %v721
        %v789 = vpop.f32.mrb[0].mxu0
        %v790 = vadd.f32 0.0, %v789
        %v791 = vpop.f32.mrb[0].mxu0
        %v792 = vadd.f32 0.0, %v791
        %793 = vdwg.mxu0
        %v794 = vadd.f32 %v698, %v790
        %v795 = vadd.f32 %v699, %v792
        %v797 = vsel %vm455, %v400, 0
        %799 = vmatprep.subr.mxu0 %v395
        %800 = vmatpush1.msra.mxu0 %v394
        %801 = vmatprep.subr.mxu0 0.0
        %802 = vmatpush1.msra.mxu0 0.0
        %803 = vmatprep.subr.mxu0 0.0
        %804 = vmatpush1.msra.mxu0 0.0
        %805 = vmatprep.subr.mxu0 0.0
        %806 = vmatpush1.msra.mxu0 0.0
        %807 = vmatprep.subr.mxu0 0.0
        %808 = vmatpush1.msra.mxu0 0.0
        %809 = vmatprep.subr.mxu0 0.0
        %810 = vmatpush1.msra.mxu0 0.0
        %811 = vmatprep.subr.mxu0 0.0
        %812 = vmatpush1.msra.mxu0 0.0
        %813 = vmatprep.subr.mxu0 0.0
        %814 = vmatpush1.msra.mxu0 0.0
        %815 = vmatprep.subr.mxu0 0.0
        %816 = vmatpush1.msra.mxu0 0.0
        %817 = vmatprep.subr.mxu0 0.0
        %818 = vmatpush1.msra.mxu0 0.0
        %819 = vmatprep.subr.mxu0 0.0
        %820 = vmatpush1.msra.mxu0 0.0
        %821 = vmatprep.subr.mxu0 0.0
        %822 = vmatpush1.msra.mxu0 0.0
        %823 = vmatprep.subr.mxu0 0.0
        %824 = vmatpush1.msra.mxu0 0.0
        %825 = vmatprep.subr.mxu0 0.0
        %826 = vmatpush1.msra.mxu0 0.0
        %827 = vmatprep.subr.mxu0 0.0
        %828 = vmatpush1.msra.mxu0 0.0
        %829 = vmatprep.subr.mxu0 0.0
        %830 = vmatpush1.msra.mxu0 0.0
        %831 = vmatprep.subr.mxu0 0.0
        %832 = vmatpush1.msra.mxu0 0.0
        %833 = vmatprep.subr.mxu0 0.0
        %834 = vmatpush1.msra.mxu0 0.0
        %835 = vmatprep.subr.mxu0 0.0
        %836 = vmatpush1.msra.mxu0 0.0
        %837 = vmatprep.subr.mxu0 0.0
        %838 = vmatpush1.msra.mxu0 0.0
        %839 = vmatprep.subr.mxu0 0.0
        %840 = vmatpush1.msra.mxu0 0.0
        %841 = vmatprep.subr.mxu0 0.0
        %842 = vmatpush1.msra.mxu0 0.0
        %843 = vmatprep.subr.mxu0 0.0
        %844 = vmatpush1.msra.mxu0 0.0
        %845 = vmatprep.subr.mxu0 0.0
        %846 = vmatpush1.msra.mxu0 0.0
        %847 = vmatprep.subr.mxu0 0.0
        %848 = vmatpush1.msra.mxu0 0.0
        %849 = vmatprep.subr.mxu0 0.0
        %850 = vmatpush1.msra.mxu0 0.0
        %851 = vmatprep.subr.mxu0 0.0
        %852 = vmatpush1.msra.mxu0 0.0
        %853 = vmatprep.subr.mxu0 0.0
        %854 = vmatpush1.msra.mxu0 0.0
        %855 = vmatprep.subr.mxu0 0.0
        %856 = vmatpush1.msra.mxu0 0.0
        %857 = vmatprep.subr.mxu0 0.0
        %858 = vmatpush1.msra.mxu0 0.0
        %859 = vmatprep.subr.mxu0 0.0
        %860 = vmatpush1.msra.mxu0 0.0
        %861 = vmatprep.subr.mxu0 0.0
        %862 = vmatpush1.msra.mxu0 0.0
        %863 = vmatprep.mubr.f32.mxu0 0.0
        %864 = vmatmul.mubr.f32.gmra.mrb[0].mxu0 %v797
        %v865 = vpop.f32.mrb[0].mxu0
        %v866 = vadd.f32 0.0, %v865
        %v867 = vpop.f32.mrb[0].mxu0
        %v868 = vadd.f32 0.0, %v867
        %869 = vdwg.mxu0
        %v870 = vadd.f32 %v794, %v866
        %v871 = vadd.f32 %v795, %v868
        %872 = vrot.lane.b32.xlu0 %v394, 127
        %v873 = vpop.permute.xlu0 %872
        %874 = vrot.lane.b32.xlu0 %v395, 127
        %v875 = vpop.permute.xlu0 %874
        %vm876 = vcmp.lt.s32.totalorder %v418, 127
        %v877 = vsel %vm876, %v873, %v875
        %v878 = vsel %vm876, %v875, %v873
        %v880 = vlaneseq
        %v881 = vshrl.u32 %v880, 7
        %v882 = vsub.s32 0, %v881
        %v883 = vrot.slane %v409, %v882
        %v884 = vlaneseq
        %v885 = vshrl.u32 %v884, 7
        %v886 = vsub.s32 1, %v885
        %v887 = vrot.slane %v409, %v886
        %v890 = vmul.f32 %v877, %v883
        %v891 = vmul.f32 %v878, %v887
        %v893 = vsel %vm455, %v401, 0
        %895 = vmatprep.subr.mxu0 %v891
        %896 = vmatpush1.msra.mxu0 %v890
        %897 = vmatprep.subr.mxu0 0.0
        %898 = vmatpush1.msra.mxu0 0.0
        %899 = vmatprep.subr.mxu0 0.0
        %900 = vmatpush1.msra.mxu0 0.0
        %901 = vmatprep.subr.mxu0 0.0
        %902 = vmatpush1.msra.mxu0 0.0
        %903 = vmatprep.subr.mxu0 0.0
        %904 = vmatpush1.msra.mxu0 0.0
        %905 = vmatprep.subr.mxu0 0.0
        %906 = vmatpush1.msra.mxu0 0.0
        %907 = vmatprep.subr.mxu0 0.0
        %908 = vmatpush1.msra.mxu0 0.0
        %909 = vmatprep.subr.mxu0 0.0
        %910 = vmatpush1.msra.mxu0 0.0
        %911 = vmatprep.subr.mxu0 0.0
        %912 = vmatpush1.msra.mxu0 0.0
        %913 = vmatprep.subr.mxu0 0.0
        %914 = vmatpush1.msra.mxu0 0.0
        %915 = vmatprep.subr.mxu0 0.0
        %916 = vmatpush1.msra.mxu0 0.0
        %917 = vmatprep.subr.mxu0 0.0
        %918 = vmatpush1.msra.mxu0 0.0
        %919 = vmatprep.subr.mxu0 0.0
        %920 = vmatpush1.msra.mxu0 0.0
        %921 = vmatprep.subr.mxu0 0.0
        %922 = vmatpush1.msra.mxu0 0.0
        %923 = vmatprep.subr.mxu0 0.0
        %924 = vmatpush1.msra.mxu0 0.0
        %925 = vmatprep.subr.mxu0 0.0
        %926 = vmatpush1.msra.mxu0 0.0
        %927 = vmatprep.subr.mxu0 0.0
        %928 = vmatpush1.msra.mxu0 0.0
        %929 = vmatprep.subr.mxu0 0.0
        %930 = vmatpush1.msra.mxu0 0.0
        %931 = vmatprep.subr.mxu0 0.0
        %932 = vmatpush1.msra.mxu0 0.0
        %933 = vmatprep.subr.mxu0 0.0
        %934 = vmatpush1.msra.mxu0 0.0
        %935 = vmatprep.subr.mxu0 0.0
        %936 = vmatpush1.msra.mxu0 0.0
        %937 = vmatprep.subr.mxu0 0.0
        %938 = vmatpush1.msra.mxu0 0.0
        %939 = vmatprep.subr.mxu0 0.0
        %940 = vmatpush1.msra.mxu0 0.0
        %941 = vmatprep.subr.mxu0 0.0
        %942 = vmatpush1.msra.mxu0 0.0
        %943 = vmatprep.subr.mxu0 0.0
        %944 = vmatpush1.msra.mxu0 0.0
        %945 = vmatprep.subr.mxu0 0.0
        %946 = vmatpush1.msra.mxu0 0.0
        %947 = vmatprep.subr.mxu0 0.0
        %948 = vmatpush1.msra.mxu0 0.0
        %949 = vmatprep.subr.mxu0 0.0
        %950 = vmatpush1.msra.mxu0 0.0
        %951 = vmatprep.subr.mxu0 0.0
        %952 = vmatpush1.msra.mxu0 0.0
        %953 = vmatprep.subr.mxu0 0.0
        %954 = vmatpush1.msra.mxu0 0.0
        %955 = vmatprep.subr.mxu0 0.0
        %956 = vmatpush1.msra.mxu0 0.0
        %957 = vmatprep.subr.mxu0 0.0
        %958 = vmatpush1.msra.mxu0 0.0
        %959 = vmatprep.mubr.f32.mxu0 0.0
        %960 = vmatmul.mubr.f32.gmra.mrb[0].mxu0 %v893
        %v961 = vpop.f32.mrb[0].mxu0
        %v962 = vadd.f32 0.0, %v961
        %v963 = vpop.f32.mrb[0].mxu0
        %v964 = vadd.f32 0.0, %v963
        %965 = vdwg.mxu0
        %v966 = vadd.f32 %v870, %v962
        %v967 = vadd.f32 %v871, %v964
        %968 = vrot.lane.b32.xlu0 %v394, 113
        %v969 = vpop.permute.xlu0 %968
        %970 = vrot.lane.b32.xlu0 %v395, 113
        %v971 = vpop.permute.xlu0 %970
        %vm972 = vcmp.lt.s32.totalorder %v418, 113
        %v973 = vsel %vm972, %v969, %v971
        %v974 = vsel %vm972, %v971, %v969
        %v976 = vlaneseq
        %v977 = vshrl.u32 %v976, 7
        %v978 = vsub.s32 0, %v977
        %v979 = vrot.slane %v410, %v978
        %v980 = vlaneseq
        %v981 = vshrl.u32 %v980, 7
        %v982 = vsub.s32 1, %v981
        %v983 = vrot.slane %v410, %v982
        %v986 = vmul.f32 %v973, %v979
        %v987 = vmul.f32 %v974, %v983
        %v989 = vsel %vm455, %v402, 0
        %991 = vmatprep.subr.mxu0 %v987
        %992 = vmatpush1.msra.mxu0 %v986
        %993 = vmatprep.subr.mxu0 0.0
        %994 = vmatpush1.msra.mxu0 0.0
        %995 = vmatprep.subr.mxu0 0.0
        %996 = vmatpush1.msra.mxu0 0.0
        %997 = vmatprep.subr.mxu0 0.0
        %998 = vmatpush1.msra.mxu0 0.0
        %999 = vmatprep.subr.mxu0 0.0
        %1000 = vmatpush1.msra.mxu0 0.0
        %1001 = vmatprep.subr.mxu0 0.0
        %1002 = vmatpush1.msra.mxu0 0.0
        %1003 = vmatprep.subr.mxu0 0.0
        %1004 = vmatpush1.msra.mxu0 0.0
        %1005 = vmatprep.subr.mxu0 0.0
        %1006 = vmatpush1.msra.mxu0 0.0
        %1007 = vmatprep.subr.mxu0 0.0
        %1008 = vmatpush1.msra.mxu0 0.0
        %1009 = vmatprep.subr.mxu0 0.0
        %1010 = vmatpush1.msra.mxu0 0.0
        %1011 = vmatprep.subr.mxu0 0.0
        %1012 = vmatpush1.msra.mxu0 0.0
        %1013 = vmatprep.subr.mxu0 0.0
        %1014 = vmatpush1.msra.mxu0 0.0
        %1015 = vmatprep.subr.mxu0 0.0
        %1016 = vmatpush1.msra.mxu0 0.0
        %1017 = vmatprep.subr.mxu0 0.0
        %1018 = vmatpush1.msra.mxu0 0.0
        %1019 = vmatprep.subr.mxu0 0.0
        %1020 = vmatpush1.msra.mxu0 0.0
        %1021 = vmatprep.subr.mxu0 0.0
        %1022 = vmatpush1.msra.mxu0 0.0
        %1023 = vmatprep.subr.mxu0 0.0
        %1024 = vmatpush1.msra.mxu0 0.0
        %1025 = vmatprep.subr.mxu0 0.0
        %1026 = vmatpush1.msra.mxu0 0.0
        %1027 = vmatprep.subr.mxu0 0.0
        %1028 = vmatpush1.msra.mxu0 0.0
        %1029 = vmatprep.subr.mxu0 0.0
        %1030 = vmatpush1.msra.mxu0 0.0
        %1031 = vmatprep.subr.mxu0 0.0
        %1032 = vmatpush1.msra.mxu0 0.0
        %1033 = vmatprep.subr.mxu0 0.0
        %1034 = vmatpush1.msra.mxu0 0.0
        %1035 = vmatprep.subr.mxu0 0.0
        %1036 = vmatpush1.msra.mxu0 0.0
        %1037 = vmatprep.subr.mxu0 0.0
        %1038 = vmatpush1.msra.mxu0 0.0
        %1039 = vmatprep.subr.mxu0 0.0
        %1040 = vmatpush1.msra.mxu0 0.0
        %1041 = vmatprep.subr.mxu0 0.0
        %1042 = vmatpush1.msra.mxu0 0.0
        %1043 = vmatprep.subr.mxu0 0.0
        %1044 = vmatpush1.msra.mxu0 0.0
        %1045 = vmatprep.subr.mxu0 0.0
        %1046 = vmatpush1.msra.mxu0 0.0
        %1047 = vmatprep.subr.mxu0 0.0
        %1048 = vmatpush1.msra.mxu0 0.0
        %1049 = vmatprep.subr.mxu0 0.0
        %1050 = vmatpush1.msra.mxu0 0.0
        %1051 = vmatprep.subr.mxu0 0.0
        %1052 = vmatpush1.msra.mxu0 0.0
        %1053 = vmatprep.subr.mxu0 0.0
        %1054 = vmatpush1.msra.mxu0 0.0
        %1055 = vmatprep.mubr.f32.mxu0 0.0
        %1056 = vmatmul.mubr.f32.gmra.mrb[0].mxu0 %v989
        %v1057 = vpop.f32.mrb[0].mxu0
        %v1058 = vadd.f32 0.0, %v1057
        %v1059 = vpop.f32.mrb[0].mxu0
        %v1060 = vadd.f32 0.0, %v1059
        %1061 = vdwg.mxu0
        %v1062 = vadd.f32 %v966, %v1058
        %v1063 = vadd.f32 %v967, %v1060
        %1064 = vrot.lane.b32.xlu0 %v394, 112
        %v1065 = vpop.permute.xlu0 %1064
        %1066 = vrot.lane.b32.xlu0 %v395, 112
        %v1067 = vpop.permute.xlu0 %1066
        %vm1068 = vcmp.lt.s32.totalorder %v418, 112
        %v1069 = vsel %vm1068, %v1065, %v1067
        %v1070 = vsel %vm1068, %v1067, %v1065
        %v1072 = vlaneseq
        %v1073 = vshrl.u32 %v1072, 7
        %v1074 = vsub.s32 0, %v1073
        %v1075 = vrot.slane %v411, %v1074
        %v1076 = vlaneseq
        %v1077 = vshrl.u32 %v1076, 7
        %v1078 = vsub.s32 1, %v1077
        %v1079 = vrot.slane %v411, %v1078
        %v1082 = vmul.f32 %v1069, %v1075
        %v1083 = vmul.f32 %v1070, %v1079
        %v1085 = vsel %vm455, %v403, 0
        %1087 = vmatprep.subr.mxu0 %v1083
        %1088 = vmatpush1.msra.mxu0 %v1082
        %1089 = vmatprep.subr.mxu0 0.0
        %1090 = vmatpush1.msra.mxu0 0.0
        %1091 = vmatprep.subr.mxu0 0.0
        %1092 = vmatpush1.msra.mxu0 0.0
        %1093 = vmatprep.subr.mxu0 0.0
        %1094 = vmatpush1.msra.mxu0 0.0
        %1095 = vmatprep.subr.mxu0 0.0
        %1096 = vmatpush1.msra.mxu0 0.0
        %1097 = vmatprep.subr.mxu0 0.0
        %1098 = vmatpush1.msra.mxu0 0.0
        %1099 = vmatprep.subr.mxu0 0.0
        %1100 = vmatpush1.msra.mxu0 0.0
        %1101 = vmatprep.subr.mxu0 0.0
        %1102 = vmatpush1.msra.mxu0 0.0
        %1103 = vmatprep.subr.mxu0 0.0
        %1104 = vmatpush1.msra.mxu0 0.0
        %1105 = vmatprep.subr.mxu0 0.0
        %1106 = vmatpush1.msra.mxu0 0.0
        %1107 = vmatprep.subr.mxu0 0.0
        %1108 = vmatpush1.msra.mxu0 0.0
        %1109 = vmatprep.subr.mxu0 0.0
        %1110 = vmatpush1.msra.mxu0 0.0
        %1111 = vmatprep.subr.mxu0 0.0
        %1112 = vmatpush1.msra.mxu0 0.0
        %1113 = vmatprep.subr.mxu0 0.0
        %1114 = vmatpush1.msra.mxu0 0.0
        %1115 = vmatprep.subr.mxu0 0.0
        %1116 = vmatpush1.msra.mxu0 0.0
        %1117 = vmatprep.subr.mxu0 0.0
        %1118 = vmatpush1.msra.mxu0 0.0
        %1119 = vmatprep.subr.mxu0 0.0
        %1120 = vmatpush1.msra.mxu0 0.0
        %1121 = vmatprep.subr.mxu0 0.0
        %1122 = vmatpush1.msra.mxu0 0.0
        %1123 = vmatprep.subr.mxu0 0.0
        %1124 = vmatpush1.msra.mxu0 0.0
        %1125 = vmatprep.subr.mxu0 0.0
        %1126 = vmatpush1.msra.mxu0 0.0
        %1127 = vmatprep.subr.mxu0 0.0
        %1128 = vmatpush1.msra.mxu0 0.0
        %1129 = vmatprep.subr.mxu0 0.0
        %1130 = vmatpush1.msra.mxu0 0.0
        %1131 = vmatprep.subr.mxu0 0.0
        %1132 = vmatpush1.msra.mxu0 0.0
        %1133 = vmatprep.subr.mxu0 0.0
        %1134 = vmatpush1.msra.mxu0 0.0
        %1135 = vmatprep.subr.mxu0 0.0
        %1136 = vmatpush1.msra.mxu0 0.0
        %1137 = vmatprep.subr.mxu0 0.0
        %1138 = vmatpush1.msra.mxu0 0.0
        %1139 = vmatprep.subr.mxu0 0.0
        %1140 = vmatpush1.msra.mxu0 0.0
        %1141 = vmatprep.subr.mxu0 0.0
        %1142 = vmatpush1.msra.mxu0 0.0
        %1143 = vmatprep.subr.mxu0 0.0
        %1144 = vmatpush1.msra.mxu0 0.0
        %1145 = vmatprep.subr.mxu0 0.0
        %1146 = vmatpush1.msra.mxu0 0.0
        %1147 = vmatprep.subr.mxu0 0.0
        %1148 = vmatpush1.msra.mxu0 0.0
        %1149 = vmatprep.subr.mxu0 0.0
        %1150 = vmatpush1.msra.mxu0 0.0
        %1151 = vmatprep.mubr.f32.mxu0 0.0
        %1152 = vmatmul.mubr.f32.gmra.mrb[0].mxu0 %v1085
        %v1153 = vpop.f32.mrb[0].mxu0
        %v1154 = vadd.f32 0.0, %v1153
        %v1155 = vpop.f32.mrb[0].mxu0
        %v1156 = vadd.f32 0.0, %v1155
        %1157 = vdwg.mxu0
        %v1158 = vadd.f32 %v1062, %v1154
        %v1159 = vadd.f32 %v1063, %v1156
        %1160 = vrot.lane.b32.xlu0 %v394, 111
        %v1161 = vpop.permute.xlu0 %1160
        %1162 = vrot.lane.b32.xlu0 %v395, 111
        %v1163 = vpop.permute.xlu0 %1162
        %vm1164 = vcmp.lt.s32.totalorder %v418, 111
        %v1165 = vsel %vm1164, %v1161, %v1163
        %v1166 = vsel %vm1164, %v1163, %v1161
        %v1168 = vlaneseq
        %v1169 = vshrl.u32 %v1168, 7
        %v1170 = vsub.s32 0, %v1169
        %v1171 = vrot.slane %v412, %v1170
        %v1172 = vlaneseq
        %v1173 = vshrl.u32 %v1172, 7
        %v1174 = vsub.s32 1, %v1173
        %v1175 = vrot.slane %v412, %v1174
        %v1178 = vmul.f32 %v1165, %v1171
        %v1179 = vmul.f32 %v1166, %v1175
        %v1181 = vsel %vm455, %v404, 0
        %1183 = vmatprep.subr.mxu0 %v1179
        %1184 = vmatpush1.msra.mxu0 %v1178
        %1185 = vmatprep.subr.mxu0 0.0
        %1186 = vmatpush1.msra.mxu0 0.0
        %1187 = vmatprep.subr.mxu0 0.0
        %1188 = vmatpush1.msra.mxu0 0.0
        %1189 = vmatprep.subr.mxu0 0.0
        %1190 = vmatpush1.msra.mxu0 0.0
        %1191 = vmatprep.subr.mxu0 0.0
        %1192 = vmatpush1.msra.mxu0 0.0
        %1193 = vmatprep.subr.mxu0 0.0
        %1194 = vmatpush1.msra.mxu0 0.0
        %1195 = vmatprep.subr.mxu0 0.0
        %1196 = vmatpush1.msra.mxu0 0.0
        %1197 = vmatprep.subr.mxu0 0.0
        %1198 = vmatpush1.msra.mxu0 0.0
        %1199 = vmatprep.subr.mxu0 0.0
        %1200 = vmatpush1.msra.mxu0 0.0
        %1201 = vmatprep.subr.mxu0 0.0
        %1202 = vmatpush1.msra.mxu0 0.0
        %1203 = vmatprep.subr.mxu0 0.0
        %1204 = vmatpush1.msra.mxu0 0.0
        %1205 = vmatprep.subr.mxu0 0.0
        %1206 = vmatpush1.msra.mxu0 0.0
        %1207 = vmatprep.subr.mxu0 0.0
        %1208 = vmatpush1.msra.mxu0 0.0
        %1209 = vmatprep.subr.mxu0 0.0
        %1210 = vmatpush1.msra.mxu0 0.0
        %1211 = vmatprep.subr.mxu0 0.0
        %1212 = vmatpush1.msra.mxu0 0.0
        %1213 = vmatprep.subr.mxu0 0.0
        %1214 = vmatpush1.msra.mxu0 0.0
        %1215 = vmatprep.subr.mxu0 0.0
        %1216 = vmatpush1.msra.mxu0 0.0
        %1217 = vmatprep.subr.mxu0 0.0
        %1218 = vmatpush1.msra.mxu0 0.0
        %1219 = vmatprep.subr.mxu0 0.0
        %1220 = vmatpush1.msra.mxu0 0.0
        %1221 = vmatprep.subr.mxu0 0.0
        %1222 = vmatpush1.msra.mxu0 0.0
        %1223 = vmatprep.subr.mxu0 0.0
        %1224 = vmatpush1.msra.mxu0 0.0
        %1225 = vmatprep.subr.mxu0 0.0
        %1226 = vmatpush1.msra.mxu0 0.0
        %1227 = vmatprep.subr.mxu0 0.0
        %1228 = vmatpush1.msra.mxu0 0.0
        %1229 = vmatprep.subr.mxu0 0.0
        %1230 = vmatpush1.msra.mxu0 0.0
        %1231 = vmatprep.subr.mxu0 0.0
        %1232 = vmatpush1.msra.mxu0 0.0
        %1233 = vmatprep.subr.mxu0 0.0
        %1234 = vmatpush1.msra.mxu0 0.0
        %1235 = vmatprep.subr.mxu0 0.0
        %1236 = vmatpush1.msra.mxu0 0.0
        %1237 = vmatprep.subr.mxu0 0.0
        %1238 = vmatpush1.msra.mxu0 0.0
        %1239 = vmatprep.subr.mxu0 0.0
        %1240 = vmatpush1.msra.mxu0 0.0
        %1241 = vmatprep.subr.mxu0 0.0
        %1242 = vmatpush1.msra.mxu0 0.0
        %1243 = vmatprep.subr.mxu0 0.0
        %1244 = vmatpush1.msra.mxu0 0.0
        %1245 = vmatprep.subr.mxu0 0.0
        %1246 = vmatpush1.msra.mxu0 0.0
        %1247 = vmatprep.mubr.f32.mxu0 0.0
        %1248 = vmatmul.mubr.f32.gmra.mrb[0].mxu0 %v1181
        %v1249 = vpop.f32.mrb[0].mxu0
        %v1250 = vadd.f32 0.0, %v1249
        %v1251 = vpop.f32.mrb[0].mxu0
        %v1252 = vadd.f32 0.0, %v1251
        %1253 = vdwg.mxu0
        %v1254 = vadd.f32 %v1158, %v1250
        %v1255 = vadd.f32 %v1159, %v1252
        %v1256 = vld [vmem:[%s4] sm:$0xf]
        %1258 = vset.pattern.permute.xlu0 0
        %1259 = vperm.xlu0 %1258, %v1256
        %v1260 = vpop.permute.xlu0 %1259
        %v1262 = vadd.f32 %v1254, %v1260
        %v1263 = vadd.f32 %v1255, %v1260
        %v1264 = vmax.f32 %v1262, 0.0
        %v1265 = vmax.f32 %v1263, 0.0
        %v1266 = vld [vmem:[%s5] sm:$0xf]
        %v1267 = vld [vmem:[%s6] sm:$0xf]
        %1269 = vset.pattern.permute.xlu0 0
        %1270 = vperm.xlu0 %1269, %v1267
        %v1271 = vpop.permute.xlu0 %1270
        %v1274 = vsel %vm314, %v1266, 0
        %1276 = vmatprep.subr.mxu0 %v321
        %1277 = vmatpush1.msra.mxu0 %v319
        %1278 = vmatprep.subr.mxu0 0.0
        %1279 = vmatpush1.msra.mxu0 0.0
        %1280 = vmatprep.subr.mxu0 0.0
        %1281 = vmatpush1.msra.mxu0 0.0
        %1282 = vmatprep.subr.mxu0 0.0
        %1283 = vmatpush1.msra.mxu0 0.0
        %1284 = vmatprep.subr.mxu0 0.0
        %1285 = vmatpush1.msra.mxu0 0.0
        %1286 = vmatprep.subr.mxu0 0.0
        %1287 = vmatpush1.msra.mxu0 0.0
        %1288 = vmatprep.subr.mxu0 0.0
        %1289 = vmatpush1.msra.mxu0 0.0
        %1290 = vmatprep.subr.mxu0 0.0
        %1291 = vmatpush1.msra.mxu0 0.0
        %1292 = vmatprep.subr.mxu0 0.0
        %1293 = vmatpush1.msra.mxu0 0.0
        %1294 = vmatprep.subr.mxu0 0.0
        %1295 = vmatpush1.msra.mxu0 0.0
        %1296 = vmatprep.subr.mxu0 0.0
        %1297 = vmatpush1.msra.mxu0 0.0
        %1298 = vmatprep.subr.mxu0 0.0
        %1299 = vmatpush1.msra.mxu0 0.0
        %1300 = vmatprep.subr.mxu0 0.0
        %1301 = vmatpush1.msra.mxu0 0.0
        %1302 = vmatprep.subr.mxu0 0.0
        %1303 = vmatpush1.msra.mxu0 0.0
        %1304 = vmatprep.subr.mxu0 0.0
        %1305 = vmatpush1.msra.mxu0 0.0
        %1306 = vmatprep.subr.mxu0 0.0
        %1307 = vmatpush1.msra.mxu0 0.0
        %1308 = vmatprep.subr.mxu0 0.0
        %1309 = vmatpush1.msra.mxu0 0.0
        %1310 = vmatprep.subr.mxu0 0.0
        %1311 = vmatpush1.msra.mxu0 0.0
        %1312 = vmatprep.subr.mxu0 0.0
        %1313 = vmatpush1.msra.mxu0 0.0
        %1314 = vmatprep.subr.mxu0 0.0
        %1315 = vmatpush1.msra.mxu0 0.0
        %1316 = vmatprep.subr.mxu0 0.0
        %1317 = vmatpush1.msra.mxu0 0.0
        %1318 = vmatprep.subr.mxu0 0.0
        %1319 = vmatpush1.msra.mxu0 0.0
        %1320 = vmatprep.subr.mxu0 0.0
        %1321 = vmatpush1.msra.mxu0 0.0
        %1322 = vmatprep.subr.mxu0 0.0
        %1323 = vmatpush1.msra.mxu0 0.0
        %1324 = vmatprep.subr.mxu0 0.0
        %1325 = vmatpush1.msra.mxu0 0.0
        %1326 = vmatprep.subr.mxu0 0.0
        %1327 = vmatpush1.msra.mxu0 0.0
        %1328 = vmatprep.subr.mxu0 0.0
        %1329 = vmatpush1.msra.mxu0 0.0
        %1330 = vmatprep.subr.mxu0 0.0
        %1331 = vmatpush1.msra.mxu0 0.0
        %1332 = vmatprep.subr.mxu0 0.0
        %1333 = vmatpush1.msra.mxu0 0.0
        %1334 = vmatprep.subr.mxu0 0.0
        %1335 = vmatpush1.msra.mxu0 0.0
        %1336 = vmatprep.subr.mxu0 0.0
        %1337 = vmatpush1.msra.mxu0 0.0
        %1338 = vmatprep.subr.mxu0 0.0
        %1339 = vmatpush1.msra.mxu0 0.0
        %1340 = vmatprep.mubr.f32.mxu0 0.0
        %1341 = vmatmul.mubr.f32.gmra.mrb[0].mxu0 %v1274
        %v1342 = vpop.f32.mrb[0].mxu0
        %v1343 = vadd.f32 %v1271, %v1342
        %v1344 = vpop.f32.mrb[0].mxu0
        %v1345 = vadd.f32 %v1271, %v1344
        %1346 = vdwg.mxu0
        %v1347 = vxor.u32 %v1343, 2147483648
        %v1348 = vxor.u32 %v1345, 2147483648
        %v1349 = vmul.f32 %v1347, 1.442695
        %v1350 = vpow.pop %v1349
        %v1351 = vmul.f32 %v1348, 1.442695
        %v1352 = vpow.pop %v1351
        %v1353 = vadd.f32 %v1350, 1.0
        %v1354 = vadd.f32 %v1352, 1.0
        %v1355 = vrcp.pop %v1353
        %v1356 = vmul.f32 1.0, %v1355
        %v1357 = vrcp.pop %v1354
        %v1358 = vmul.f32 1.0, %v1357
        %v1361 = vcombine.low %v1356, %v1358
        %v1363 = vmul.f32 %v304, %v1361
        %v1366 = vcombine.low %v1264, %v1265
        %v1368 = vadd.f32 %v1363, %v1366
        %1369 = vst [vmem:[%s298] sm:$0xff] %v1368
        %s1370 = sand.u32 %s203, 1
        %s1371 = scalar_lea.sflag [#allocation3], %s1370
        %s1372 = sand.u32 %s203, 1
        %s1373 = smul.addr %s1372, 8
        %s1374 = scalar_lea.vmem [#allocation2], %s1373
        // Predicated region
        $region53: #{tpu_custom_call.1} parent=51 // pred_check
          %p1375 = pneg %p213
        $region54: #{tpu_custom_call.1} parent=51 // pred_check_branch
          %1377 = sbr.rel (%p1375) target = $region56
        $region55: #{tpu_custom_call.1} parent=51 // pred_region
          %s1379 = ssub.s32 128, 128
          %1380 = vsyncadd %s1371, %s1379
          %s1381 = smul.addr %s22, 2
          %s1382 = smul.addr %s1381, 64
          %s1383 = scalar_lea.hbm %s8, %s1382
          %s1385 = sshll.u32 %s1374, 4
          %s1386 = int_to_ptr.vmem [resolvable:$true] %s1385
          %1388 = dma.vmem_to_hbm [thread:$0]  %s1386, 128, %s1383, %s1371
        $region56: #{tpu_custom_call.1} parent=51 // pred_fallthru
          _
      $region52: #{tpu_custom_call.1} parent=5 // pred_fallthru
        _
      %p1389 = scmp.le.s32.totalorder 2, %s17
      // Predicated region
      $region57: #{tpu_custom_call.1} parent=5 // pred_check
        %p1390 = pneg %p1389
      $region58: #{tpu_custom_call.1} parent=5 // pred_check_branch
        %1392 = sbr.rel (%p1390) target = $region60
      $region59: #{tpu_custom_call.1} parent=5 // pred_region
        %s1393 = ssub.s32 %s17, 2
        // Predicated region
        $region61: #{tpu_custom_call.1} parent=59 // pred_check
          %p1394 = pneg %p219
        $region62: #{tpu_custom_call.1} parent=59 // pred_check_branch
          %1396 = sbr.rel (%p1394) target = $region64
        $region63: #{tpu_custom_call.1} parent=59 // pred_region
          %s1397 = sand.u32 %s204, 1
          %s1398 = scalar_lea.sflag [#allocation3], %s1397
          %s1399 = sand.u32 %s204, 1
          %s1400 = smul.addr %s1399, 8
          %s1401 = scalar_lea.vmem [#allocation2], %s1400
          %1402 = dma.done %s1398, 128
        $region64: #{tpu_custom_call.1} parent=59 // pred_fallthru
          _
      $region60: #{tpu_custom_call.1} parent=5 // pred_fallthru
        _
    $region6: #{tpu_custom_call.1} parent=1 // loop_footer
      %s21 = sadd.s32 1, %s17
    $region7: #{tpu_custom_call.1} parent=1 // loop_footer_branch
      %16 = sbr.rel target = $region3
    $region8: #{tpu_custom_call.1} parent=1 // loop_exit
      _
    %1403 = vsyncpa [#allocation3], 1
    %s1404 = scalar_lea.sflag [#allocation3], 1
    %1405 = vsyncpa %s1404, 1

</llo_original>
